<compile_context>
chip_gen: v7x
topology: tpu7x:2x2x1
jax: 0.10.0
libtpu: 0.0.40
codegen_flags: <defaults>
</compile_context>

<pallas_src>
import numpy as np

import jax
import jax.numpy as jnp
from jax.experimental import pallas as pl
from jax.experimental.pallas import tpu as pltpu


# ------------------------------ fused kernel -------------------------------

def _cnn_fused_kernel(x_ref, w1e_ref, w1o_ref, b1_ref, w2e_ref, w2o_ref,
                      b2_ref, g1_ref, fb1_ref, wfc2_ref, fb2_ref,
                      out_ref, xpad1, xpad2):
    f32 = jnp.float32
    B = x_ref.shape[0]
    C = b1_ref.shape[1] // 8           # conv1 channels
    C2 = 2 * C                         # conv2 channels

    # ---- conv1 (3x3, pad 1) + bias + ReLU + 2x2 max-pool, fused ------------
    xpad1[...] = jnp.zeros_like(xpad1)
    xpad1[:, 1:17, 1:17] = x_ref[...]

    acc_e = jnp.zeros((B * 16, 8 * C), f32)
    acc_o = jnp.zeros((B * 16, 8 * C), f32)
    for ky in range(3):
        lhs = xpad1[:, ky:ky + 16, :].reshape(B * 16, 18)
        acc_e += jnp.dot(lhs, w1e_ref[ky], preferred_element_type=f32)
        acc_o += jnp.dot(lhs, w1o_ref[ky], preferred_element_type=f32)
    pre = jnp.maximum(acc_e, acc_o)                   # max-pool over W (folded)
    pre = pre.reshape(B * 8, 2, 8 * C)
    pre = jnp.maximum(pre[:, 0, :], pre[:, 1, :])     # max-pool over H
    p1 = jnp.maximum(pre + b1_ref[...], 0.0)          # bias + ReLU, (B*8, 8*C)

    # ---- conv2 (3x3, pad 1) + bias + ReLU + 2x2 max-pool, fused ------------
    xpad2[...] = jnp.zeros_like(xpad2)
    xpad2[:, 1:9, C:9 * C] = p1.reshape(B, 8, 8 * C)

    acc_e = jnp.zeros((B * 8, 4 * C2), f32)
    acc_o = jnp.zeros((B * 8, 4 * C2), f32)
    for ky in range(3):
        lhs = xpad2[:, ky:ky + 8, :].reshape(B * 8, 10 * C)
        acc_e += jnp.dot(lhs, w2e_ref[ky], preferred_element_type=f32)
        acc_o += jnp.dot(lhs, w2o_ref[ky], preferred_element_type=f32)
    pre = jnp.maximum(acc_e, acc_o)
    pre = pre.reshape(B * 4, 2, 4 * C2)
    pre = jnp.maximum(pre[:, 0, :], pre[:, 1, :])
    p2 = jnp.maximum(pre + b2_ref[...], 0.0)          # (B*4, 4*C2)

    # ---- fc1 + ReLU (NCHW flatten order folded into g1 host-side) ----------
    p2r = p2.reshape(B, 4, 4 * C2)
    hid = jnp.zeros((B, fb1_ref.shape[1]), f32)
    for hh in range(4):
        hid += jnp.dot(p2r[:, hh, :], g1_ref[hh], preferred_element_type=f32)
    hid = jnp.maximum(hid + fb1_ref[...], 0.0)        # (B, hidden)

    # ---- fc2 (zero-padded to 128 columns -> lane-dense store) --------------
    out_ref[...] = (jnp.dot(hid, wfc2_ref[...], preferred_element_type=f32)
                    + fb2_ref[...])


# ------------------------------ wrapper ------------------------------------

def cnn_forward(x_nchw, prep):
    B = x_nchw.shape[0]
    C = prep['b1r'].shape[1] // 8
    assert x_nchw.shape[1:] == (1, 16, 16)
    x = x_nchw.reshape(B, 16, 16).astype(jnp.float32)   # Cin == 1: free reshape
    out_pad = pl.pallas_call(
        _cnn_fused_kernel,
        out_shape=jax.ShapeDtypeStruct((B, 128), jnp.float32),
        in_specs=[pl.BlockSpec(memory_space=pltpu.MemorySpace.VMEM)] * 11,
        out_specs=pl.BlockSpec(memory_space=pltpu.MemorySpace.VMEM),
        scratch_shapes=[pltpu.VMEM((B, 18, 18), jnp.float32),        # padded x
                        pltpu.VMEM((B, 10, 10 * C), jnp.float32)],   # padded p1
    )(x, prep['w1e'], prep['w1o'], prep['b1r'], prep['w2e'], prep['w2o'],
      prep['b2r'], prep['g1'], prep['fb1'], prep['wfc2'], prep['fb2'])
    return out_pad[:, :10]


# ------------------- one-time host-side weight reshuffle --------------------

def prepare_params(params):
    C = params['w1'].shape[0]
    C2 = 2 * C
    H1 = params['fc1_w'].shape[1]
    w1 = np.asarray(params['w1'], np.float32)     # (C, 1, 3, 3)
    b1 = np.asarray(params['b1'], np.float32)
    w2 = np.asarray(params['w2'], np.float32)     # (C2, C, 3, 3)
    b2 = np.asarray(params['b2'], np.float32)
    fc1_w = np.asarray(params['fc1_w'], np.float32)  # (C2*16, H1), row = c*16+h*4+w
    fc1_b = np.asarray(params['fc1_b'], np.float32)
    fc2_w = np.asarray(params['fc2_w'], np.float32)  # (H1, 10)
    fc2_b = np.asarray(params['fc2_b'], np.float32)

    # conv1: banded matrices mapping a padded row (18 cols) to the W-pooled
    # output columns (w_out*C + c); even / odd pool members separated.
    w1e = np.zeros((3, 18, 8 * C), np.float32)
    w1o = np.zeros((3, 18, 8 * C), np.float32)
    for ky in range(3):
        for kx in range(3):
            for wo in range(8):
                w1e[ky, 2 * wo + kx, wo * C:(wo + 1) * C] = w1[:, 0, ky, kx]
                w1o[ky, 2 * wo + 1 + kx, wo * C:(wo + 1) * C] = w1[:, 0, ky, kx]

    # conv2: same construction; input columns (w_in*C + ci), output (w_out*C2 + co).
    w2e = np.zeros((3, 10 * C, 4 * C2), np.float32)
    w2o = np.zeros((3, 10 * C, 4 * C2), np.float32)
    for ky in range(3):
        for kx in range(3):
            tap = w2[:, :, ky, kx].T                       # (ci, co)
            for wo in range(4):
                we = 2 * wo + kx
                wd = 2 * wo + 1 + kx
                w2e[ky, we * C:(we + 1) * C, wo * C2:(wo + 1) * C2] = tap
                w2o[ky, wd * C:(wd + 1) * C, wo * C2:(wo + 1) * C2] = tap

    # fc1: fold the PyTorch NCHW flatten order (c*16 + h*4 + w) into per-h slabs
    # g1[h][(w*C2 + c), n] so the kernel consumes its (h, w, c) layout directly.
    g1 = fc1_w.reshape(C2, 4, 4, H1).transpose(1, 2, 0, 3).reshape(4, 4 * C2, H1)

    # fc2: zero-pad the 10 output columns to 128 for a lane-dense store.
    wfc2 = np.zeros((H1, 128), np.float32)
    wfc2[:, :10] = fc2_w
    fb2 = np.zeros((1, 128), np.float32)
    fb2[0, :10] = fc2_b

    return {
        'w1e': jnp.asarray(w1e), 'w1o': jnp.asarray(w1o),
        'b1r': jnp.asarray(np.tile(b1, 8).reshape(1, 8 * C)),
        'w2e': jnp.asarray(w2e), 'w2o': jnp.asarray(w2o),
        'b2r': jnp.asarray(np.tile(b2, 4).reshape(1, 4 * C2)),
        'g1': jnp.asarray(g1),
        'fb1': jnp.asarray(fc1_b.reshape(1, H1)),
        'wfc2': jnp.asarray(wfc2),
        'fb2': jnp.asarray(fb2),
    }


# --------------------------- params & reference ----------------------------

def init_params(key, conv_channels, hidden_size):
    C = conv_channels
    ks = jax.random.split(key, 8)

    def u(k, shape, fan_in):
        bound = 1.0 / jnp.sqrt(jnp.float32(fan_in))
        return jax.random.uniform(k, shape, jnp.float32, -bound, bound)

    return {
        'w1': u(ks[0], (C, 1, 3, 3), 9),
        'b1': u(ks[1], (C,), 9),
        'w2': u(ks[2], (2 * C, C, 3, 3), C * 9),
        'b2': u(ks[3], (2 * C,), C * 9),
        'fc1_w': u(ks[4], (2 * C * 4 * 4, hidden_size), 2 * C * 16),
        'fc1_b': u(ks[5], (hidden_size,), 2 * C * 16),
        'fc2_w': u(ks[6], (hidden_size, 10), hidden_size),
        'fc2_b': u(ks[7], (10,), hidden_size),
    }


def ref_forward(x_nchw, params):
    """Pure-JAX reference (no Pallas) mirroring the PyTorch module."""
    x = jnp.transpose(x_nchw, (0, 2, 3, 1))

    def conv(xh, w, b):
        y = jax.lax.conv_general_dilated(
            xh, jnp.transpose(w, (2, 3, 1, 0)), window_strides=(1, 1),
            padding='SAME', dimension_numbers=('NHWC', 'HWIO', 'NHWC'))
        return jax.nn.relu(y + b)

    def pool(y):
        B, H, W, C = y.shape
        return y.reshape(B, H // 2, 2, W // 2, 2, C).max(axis=(2, 4))

    y = pool(conv(x, params['w1'], params['b1']))
    y = pool(conv(y, params['w2'], params['b2']))
    y = jnp.transpose(y, (0, 3, 1, 2)).reshape(x_nchw.shape[0], -1)
    h = jax.nn.relu(y @ params['fc1_w'] + params['fc1_b'])
    return h @ params['fc2_w'] + params['fc2_b']


# ----------------------------------- main -----------------------------------

if __name__ == "__main__":
    config = {'conv_channels': 4, 'hidden_size': 32}
    key = jax.random.PRNGKey(0)
    k_x, k_p = jax.random.split(key)
    params = init_params(k_p, config['conv_channels'], config['hidden_size'])
    prep = prepare_params(params)            # one-time, host-side
    x = jax.random.normal(k_x, (2, 1, 16, 16), jnp.float32)   # NCHW, like PyTorch

    out = jax.block_until_ready(jax.jit(cnn_forward)(x, prep))
    assert out.shape == (2, 10) and out.dtype == jnp.float32

    ref = jax.block_until_ready(ref_forward(x, params))
    assert jnp.allclose(out, ref, atol=1e-3, rtol=1e-3), (out, ref)

    print("KERNEL_OK")
</pallas_src>

<mosaic_0001>
module attributes {stable_mosaic.version = 11 : i64} {
  func.func @_cnn_fused_kernel(%arg0: memref<2x16x16xf32, #tpu.memory_space<vmem>>, %arg1: memref<3x18x32xf32, #tpu.memory_space<vmem>>, %arg2: memref<3x18x32xf32, #tpu.memory_space<vmem>>, %arg3: memref<1x32xf32, #tpu.memory_space<vmem>>, %arg4: memref<3x40x32xf32, #tpu.memory_space<vmem>>, %arg5: memref<3x40x32xf32, #tpu.memory_space<vmem>>, %arg6: memref<1x32xf32, #tpu.memory_space<vmem>>, %arg7: memref<4x32x32xf32, #tpu.memory_space<vmem>>, %arg8: memref<1x32xf32, #tpu.memory_space<vmem>>, %arg9: memref<32x128xf32, #tpu.memory_space<vmem>>, %arg10: memref<1x128xf32, #tpu.memory_space<vmem>>, %arg11: memref<2x128xf32, #tpu.memory_space<vmem>>, %arg12: memref<2x18x18xf32, #tpu.memory_space<vmem>>, %arg13: memref<2x10x40xf32, #tpu.memory_space<vmem>>) attributes {dimension_semantics = [], scalar_prefetch = 0 : i64, scratch_operands = 2 : i64, tpu.core_type = #tpu.core_type<tc>} {
    %cst = arith.constant 0.000000e+00 : f32
    %0 = vector.broadcast %cst : f32 to vector<2x18x18xf32>
    %c0 = arith.constant 0 : index
    %c0_0 = arith.constant 0 : index
    %c0_1 = arith.constant 0 : index
    %1 = vector.load %arg12[%c0, %c0_0, %c0_1] : memref<2x18x18xf32, #tpu.memory_space<vmem>>, vector<2x18x18xf32>
    tpu.vector_store %arg12[%c0, %c0_0, %c0_1], %0 {strides = array<i32>} : memref<2x18x18xf32, #tpu.memory_space<vmem>>, vector<2x18x18xf32>,
    %c0_2 = arith.constant 0 : index
    %c0_3 = arith.constant 0 : index
    %c0_4 = arith.constant 0 : index
    %2 = vector.load %arg0[%c0_2, %c0_3, %c0_4] : memref<2x16x16xf32, #tpu.memory_space<vmem>>, vector<2x16x16xf32>
    %c0_5 = arith.constant 0 : index
    %c1 = arith.constant 1 : index
    %c1_6 = arith.constant 1 : index
    %3 = vector.load %arg12[%c0_5, %c1, %c1_6] : memref<2x18x18xf32, #tpu.memory_space<vmem>>, vector<2x16x16xf32>
    tpu.vector_store %arg12[%c0_5, %c1, %c1_6], %2 {strides = array<i32>} : memref<2x18x18xf32, #tpu.memory_space<vmem>>, vector<2x16x16xf32>,
    %cst_7 = arith.constant 0.000000e+00 : f32
    %4 = vector.broadcast %cst_7 : f32 to vector<32x32xf32>
    %cst_8 = arith.constant 0.000000e+00 : f32
    %5 = vector.broadcast %cst_8 : f32 to vector<32x32xf32>
    %c0_9 = arith.constant 0 : index
    %c0_10 = arith.constant 0 : index
    %c0_11 = arith.constant 0 : index
    %6 = vector.load %arg12[%c0_9, %c0_10, %c0_11] : memref<2x18x18xf32, #tpu.memory_space<vmem>>, vector<2x16x18xf32>
    %7 = vector.shape_cast %6 : vector<2x16x18xf32> to vector<32x18xf32>
    %c0_12 = arith.constant 0 : index
    %c0_13 = arith.constant 0 : index
    %c0_14 = arith.constant 0 : index
    %8 = vector.load %arg1[%c0_12, %c0_13, %c0_14] : memref<3x18x32xf32, #tpu.memory_space<vmem>>, vector<1x18x32xf32>
    %9 = vector.shape_cast %8 : vector<1x18x32xf32> to vector<18x32xf32>
    %cst_15 = arith.constant dense<0.000000e+00> : vector<32x32xf32>
    %10 = tpu.matmul %7, %9, %cst_15 {dimension_numbers = #tpu.dot_dimension_numbers<[1], [0], [0], [1], [0, 0, 1, 1], [], []>} : vector<32x18xf32>, vector<18x32xf32>, vector<32x32xf32> -> vector<32x32xf32>
    %11 = arith.addf %4, %10 : vector<32x32xf32>
    %c0_16 = arith.constant 0 : index
    %c0_17 = arith.constant 0 : index
    %c0_18 = arith.constant 0 : index
    %12 = vector.load %arg2[%c0_16, %c0_17, %c0_18] : memref<3x18x32xf32, #tpu.memory_space<vmem>>, vector<1x18x32xf32>
    %13 = vector.shape_cast %12 : vector<1x18x32xf32> to vector<18x32xf32>
    %cst_19 = arith.constant dense<0.000000e+00> : vector<32x32xf32>
    %14 = tpu.matmul %7, %13, %cst_19 {dimension_numbers = #tpu.dot_dimension_numbers<[1], [0], [0], [1], [0, 0, 1, 1], [], []>} : vector<32x18xf32>, vector<18x32xf32>, vector<32x32xf32> -> vector<32x32xf32>
    %15 = arith.addf %5, %14 : vector<32x32xf32>
    %c0_20 = arith.constant 0 : index
    %c1_21 = arith.constant 1 : index
    %c0_22 = arith.constant 0 : index
    %16 = vector.load %arg12[%c0_20, %c1_21, %c0_22] : memref<2x18x18xf32, #tpu.memory_space<vmem>>, vector<2x16x18xf32>
    %17 = vector.shape_cast %16 : vector<2x16x18xf32> to vector<32x18xf32>
    %c1_23 = arith.constant 1 : index
    %c0_24 = arith.constant 0 : index
    %c0_25 = arith.constant 0 : index
    %18 = vector.load %arg1[%c1_23, %c0_24, %c0_25] : memref<3x18x32xf32, #tpu.memory_space<vmem>>, vector<1x18x32xf32>
    %19 = vector.shape_cast %18 : vector<1x18x32xf32> to vector<18x32xf32>
    %cst_26 = arith.constant dense<0.000000e+00> : vector<32x32xf32>
    %20 = tpu.matmul %17, %19, %cst_26 {dimension_numbers = #tpu.dot_dimension_numbers<[1], [0], [0], [1], [0, 0, 1, 1], [], []>} : vector<32x18xf32>, vector<18x32xf32>, vector<32x32xf32> -> vector<32x32xf32>
    %21 = arith.addf %11, %20 : vector<32x32xf32>
    %c1_27 = arith.constant 1 : index
    %c0_28 = arith.constant 0 : index
    %c0_29 = arith.constant 0 : index
    %22 = vector.load %arg2[%c1_27, %c0_28, %c0_29] : memref<3x18x32xf32, #tpu.memory_space<vmem>>, vector<1x18x32xf32>
    %23 = vector.shape_cast %22 : vector<1x18x32xf32> to vector<18x32xf32>
    %cst_30 = arith.constant dense<0.000000e+00> : vector<32x32xf32>
    %24 = tpu.matmul %17, %23, %cst_30 {dimension_numbers = #tpu.dot_dimension_numbers<[1], [0], [0], [1], [0, 0, 1, 1], [], []>} : vector<32x18xf32>, vector<18x32xf32>, vector<32x32xf32> -> vector<32x32xf32>
    %25 = arith.addf %15, %24 : vector<32x32xf32>
    %c0_31 = arith.constant 0 : index
    %c2 = arith.constant 2 : index
    %c0_32 = arith.constant 0 : index
    %26 = vector.load %arg12[%c0_31, %c2, %c0_32] : memref<2x18x18xf32, #tpu.memory_space<vmem>>, vector<2x16x18xf32>
    %27 = vector.shape_cast %26 : vector<2x16x18xf32> to vector<32x18xf32>
    %c2_33 = arith.constant 2 : index
    %c0_34 = arith.constant 0 : index
    %c0_35 = arith.constant 0 : index
    %28 = vector.load %arg1[%c2_33, %c0_34, %c0_35] : memref<3x18x32xf32, #tpu.memory_space<vmem>>, vector<1x18x32xf32>
    %29 = vector.shape_cast %28 : vector<1x18x32xf32> to vector<18x32xf32>
    %cst_36 = arith.constant dense<0.000000e+00> : vector<32x32xf32>
    %30 = tpu.matmul %27, %29, %cst_36 {dimension_numbers = #tpu.dot_dimension_numbers<[1], [0], [0], [1], [0, 0, 1, 1], [], []>} : vector<32x18xf32>, vector<18x32xf32>, vector<32x32xf32> -> vector<32x32xf32>
    %31 = arith.addf %21, %30 : vector<32x32xf32>
    %c2_37 = arith.constant 2 : index
    %c0_38 = arith.constant 0 : index
    %c0_39 = arith.constant 0 : index
    %32 = vector.load %arg2[%c2_37, %c0_38, %c0_39] : memref<3x18x32xf32, #tpu.memory_space<vmem>>, vector<1x18x32xf32>
    %33 = vector.shape_cast %32 : vector<1x18x32xf32> to vector<18x32xf32>
    %cst_40 = arith.constant dense<0.000000e+00> : vector<32x32xf32>
    %34 = tpu.matmul %27, %33, %cst_40 {dimension_numbers = #tpu.dot_dimension_numbers<[1], [0], [0], [1], [0, 0, 1, 1], [], []>} : vector<32x18xf32>, vector<18x32xf32>, vector<32x32xf32> -> vector<32x32xf32>
    %35 = arith.addf %25, %34 : vector<32x32xf32>
    %36 = arith.maximumf %31, %35 : vector<32x32xf32>
    %37 = vector.shape_cast %36 : vector<32x32xf32> to vector<16x2x32xf32>
    %38 = vector.extract_strided_slice %37 {offsets = [0, 0, 0], sizes = [16, 1, 32], strides = [1, 1, 1]} : vector<16x2x32xf32> to vector<16x1x32xf32>
    %39 = vector.shape_cast %38 : vector<16x1x32xf32> to vector<16x32xf32>
    %40 = vector.extract_strided_slice %37 {offsets = [0, 1, 0], sizes = [16, 1, 32], strides = [1, 1, 1]} : vector<16x2x32xf32> to vector<16x1x32xf32>
    %41 = vector.shape_cast %40 : vector<16x1x32xf32> to vector<16x32xf32>
    %42 = arith.maximumf %39, %41 : vector<16x32xf32>
    %c0_41 = arith.constant 0 : index
    %c0_42 = arith.constant 0 : index
    %43 = vector.load %arg3[%c0_41, %c0_42] : memref<1x32xf32, #tpu.memory_space<vmem>>, vector<1x32xf32>
    %44 = vector.broadcast %43 : vector<1x32xf32> to vector<16x32xf32>
    %45 = arith.addf %42, %44 : vector<16x32xf32>
    %cst_43 = arith.constant 0.000000e+00 : f32
    %46 = vector.broadcast %cst_43 : f32 to vector<16x32xf32>
    %47 = arith.maximumf %45, %46 : vector<16x32xf32>
    %cst_44 = arith.constant 0.000000e+00 : f32
    %48 = vector.broadcast %cst_44 : f32 to vector<2x10x40xf32>
    %c0_45 = arith.constant 0 : index
    %c0_46 = arith.constant 0 : index
    %c0_47 = arith.constant 0 : index
    %49 = vector.load %arg13[%c0_45, %c0_46, %c0_47] : memref<2x10x40xf32, #tpu.memory_space<vmem>>, vector<2x10x40xf32>
    tpu.vector_store %arg13[%c0_45, %c0_46, %c0_47], %48 {strides = array<i32>} : memref<2x10x40xf32, #tpu.memory_space<vmem>>, vector<2x10x40xf32>,
    %50 = vector.shape_cast %47 : vector<16x32xf32> to vector<2x8x32xf32>
    %c0_48 = arith.constant 0 : index
    %c1_49 = arith.constant 1 : index
    %c4 = arith.constant 4 : index
    %51 = vector.load %arg13[%c0_48, %c1_49, %c4] : memref<2x10x40xf32, #tpu.memory_space<vmem>>, vector<2x8x32xf32>
    tpu.vector_store %arg13[%c0_48, %c1_49, %c4], %50 {strides = array<i32>} : memref<2x10x40xf32, #tpu.memory_space<vmem>>, vector<2x8x32xf32>,
    %cst_50 = arith.constant 0.000000e+00 : f32
    %52 = vector.broadcast %cst_50 : f32 to vector<16x32xf32>
    %cst_51 = arith.constant 0.000000e+00 : f32
    %53 = vector.broadcast %cst_51 : f32 to vector<16x32xf32>
    %c0_52 = arith.constant 0 : index
    %c0_53 = arith.constant 0 : index
    %c0_54 = arith.constant 0 : index
    %54 = vector.load %arg13[%c0_52, %c0_53, %c0_54] : memref<2x10x40xf32, #tpu.memory_space<vmem>>, vector<2x8x40xf32>
    %55 = vector.shape_cast %54 : vector<2x8x40xf32> to vector<16x40xf32>
    %c0_55 = arith.constant 0 : index
    %c0_56 = arith.constant 0 : index
    %c0_57 = arith.constant 0 : index
    %56 = vector.load %arg4[%c0_55, %c0_56, %c0_57] : memref<3x40x32xf32, #tpu.memory_space<vmem>>, vector<1x40x32xf32>
    %57 = vector.shape_cast %56 : vector<1x40x32xf32> to vector<40x32xf32>
    %cst_58 = arith.constant dense<0.000000e+00> : vector<16x32xf32>
    %58 = tpu.matmul %55, %57, %cst_58 {dimension_numbers = #tpu.dot_dimension_numbers<[1], [0], [0], [1], [0, 0, 1, 1], [], []>} : vector<16x40xf32>, vector<40x32xf32>, vector<16x32xf32> -> vector<16x32xf32>
    %59 = arith.addf %52, %58 : vector<16x32xf32>
    %c0_59 = arith.constant 0 : index
    %c0_60 = arith.constant 0 : index
    %c0_61 = arith.constant 0 : index
    %60 = vector.load %arg5[%c0_59, %c0_60, %c0_61] : memref<3x40x32xf32, #tpu.memory_space<vmem>>, vector<1x40x32xf32>
    %61 = vector.shape_cast %60 : vector<1x40x32xf32> to vector<40x32xf32>
    %cst_62 = arith.constant dense<0.000000e+00> : vector<16x32xf32>
    %62 = tpu.matmul %55, %61, %cst_62 {dimension_numbers = #tpu.dot_dimension_numbers<[1], [0], [0], [1], [0, 0, 1, 1], [], []>} : vector<16x40xf32>, vector<40x32xf32>, vector<16x32xf32> -> vector<16x32xf32>
    %63 = arith.addf %53, %62 : vector<16x32xf32>
    %c0_63 = arith.constant 0 : index
    %c1_64 = arith.constant 1 : index
    %c0_65 = arith.constant 0 : index
    %64 = vector.load %arg13[%c0_63, %c1_64, %c0_65] : memref<2x10x40xf32, #tpu.memory_space<vmem>>, vector<2x8x40xf32>
    %65 = vector.shape_cast %64 : vector<2x8x40xf32> to vector<16x40xf32>
    %c1_66 = arith.constant 1 : index
    %c0_67 = arith.constant 0 : index
    %c0_68 = arith.constant 0 : index
    %66 = vector.load %arg4[%c1_66, %c0_67, %c0_68] : memref<3x40x32xf32, #tpu.memory_space<vmem>>, vector<1x40x32xf32>
    %67 = vector.shape_cast %66 : vector<1x40x32xf32> to vector<40x32xf32>
    %cst_69 = arith.constant dense<0.000000e+00> : vector<16x32xf32>
    %68 = tpu.matmul %65, %67, %cst_69 {dimension_numbers = #tpu.dot_dimension_numbers<[1], [0], [0], [1], [0, 0, 1, 1], [], []>} : vector<16x40xf32>, vector<40x32xf32>, vector<16x32xf32> -> vector<16x32xf32>
    %69 = arith.addf %59, %68 : vector<16x32xf32>
    %c1_70 = arith.constant 1 : index
    %c0_71 = arith.constant 0 : index
    %c0_72 = arith.constant 0 : index
    %70 = vector.load %arg5[%c1_70, %c0_71, %c0_72] : memref<3x40x32xf32, #tpu.memory_space<vmem>>, vector<1x40x32xf32>
    %71 = vector.shape_cast %70 : vector<1x40x32xf32> to vector<40x32xf32>
    %cst_73 = arith.constant dense<0.000000e+00> : vector<16x32xf32>
    %72 = tpu.matmul %65, %71, %cst_73 {dimension_numbers = #tpu.dot_dimension_numbers<[1], [0], [0], [1], [0, 0, 1, 1], [], []>} : vector<16x40xf32>, vector<40x32xf32>, vector<16x32xf32> -> vector<16x32xf32>
    %73 = arith.addf %63, %72 : vector<16x32xf32>
    %c0_74 = arith.constant 0 : index
    %c2_75 = arith.constant 2 : index
    %c0_76 = arith.constant 0 : index
    %74 = vector.load %arg13[%c0_74, %c2_75, %c0_76] : memref<2x10x40xf32, #tpu.memory_space<vmem>>, vector<2x8x40xf32>
    %75 = vector.shape_cast %74 : vector<2x8x40xf32> to vector<16x40xf32>
    %c2_77 = arith.constant 2 : index
    %c0_78 = arith.constant 0 : index
    %c0_79 = arith.constant 0 : index
    %76 = vector.load %arg4[%c2_77, %c0_78, %c0_79] : memref<3x40x32xf32, #tpu.memory_space<vmem>>, vector<1x40x32xf32>
    %77 = vector.shape_cast %76 : vector<1x40x32xf32> to vector<40x32xf32>
    %cst_80 = arith.constant dense<0.000000e+00> : vector<16x32xf32>
    %78 = tpu.matmul %75, %77, %cst_80 {dimension_numbers = #tpu.dot_dimension_numbers<[1], [0], [0], [1], [0, 0, 1, 1], [], []>} : vector<16x40xf32>, vector<40x32xf32>, vector<16x32xf32> -> vector<16x32xf32>
    %79 = arith.addf %69, %78 : vector<16x32xf32>
    %c2_81 = arith.constant 2 : index
    %c0_82 = arith.constant 0 : index
    %c0_83 = arith.constant 0 : index
    %80 = vector.load %arg5[%c2_81, %c0_82, %c0_83] : memref<3x40x32xf32, #tpu.memory_space<vmem>>, vector<1x40x32xf32>
    %81 = vector.shape_cast %80 : vector<1x40x32xf32> to vector<40x32xf32>
    %cst_84 = arith.constant dense<0.000000e+00> : vector<16x32xf32>
    %82 = tpu.matmul %75, %81, %cst_84 {dimension_numbers = #tpu.dot_dimension_numbers<[1], [0], [0], [1], [0, 0, 1, 1], [], []>} : vector<16x40xf32>, vector<40x32xf32>, vector<16x32xf32> -> vector<16x32xf32>
    %83 = arith.addf %73, %82 : vector<16x32xf32>
    %84 = arith.maximumf %79, %83 : vector<16x32xf32>
    %85 = vector.shape_cast %84 : vector<16x32xf32> to vector<8x2x32xf32>
    %86 = vector.extract_strided_slice %85 {offsets = [0, 0, 0], sizes = [8, 1, 32], strides = [1, 1, 1]} : vector<8x2x32xf32> to vector<8x1x32xf32>
    %87 = vector.shape_cast %86 : vector<8x1x32xf32> to vector<8x32xf32>
    %88 = vector.extract_strided_slice %85 {offsets = [0, 1, 0], sizes = [8, 1, 32], strides = [1, 1, 1]} : vector<8x2x32xf32> to vector<8x1x32xf32>
    %89 = vector.shape_cast %88 : vector<8x1x32xf32> to vector<8x32xf32>
    %90 = arith.maximumf %87, %89 : vector<8x32xf32>
    %c0_85 = arith.constant 0 : index
    %c0_86 = arith.constant 0 : index
    %91 = vector.load %arg6[%c0_85, %c0_86] : memref<1x32xf32, #tpu.memory_space<vmem>>, vector<1x32xf32>
    %92 = vector.broadcast %91 : vector<1x32xf32> to vector<8x32xf32>
    %93 = arith.addf %90, %92 : vector<8x32xf32>
    %cst_87 = arith.constant 0.000000e+00 : f32
    %94 = vector.broadcast %cst_87 : f32 to vector<8x32xf32>
    %95 = arith.maximumf %93, %94 : vector<8x32xf32>
    %96 = vector.shape_cast %95 : vector<8x32xf32> to vector<2x4x32xf32>
    %cst_88 = arith.constant 0.000000e+00 : f32
    %97 = vector.broadcast %cst_88 : f32 to vector<2x32xf32>
    %98 = vector.extract_strided_slice %96 {offsets = [0, 0, 0], sizes = [2, 1, 32], strides = [1, 1, 1]} : vector<2x4x32xf32> to vector<2x1x32xf32>
    %99 = vector.shape_cast %98 : vector<2x1x32xf32> to vector<2x32xf32>
    %c0_89 = arith.constant 0 : index
    %c0_90 = arith.constant 0 : index
    %c0_91 = arith.constant 0 : index
    %100 = vector.load %arg7[%c0_89, %c0_90, %c0_91] : memref<4x32x32xf32, #tpu.memory_space<vmem>>, vector<1x32x32xf32>
    %101 = vector.shape_cast %100 : vector<1x32x32xf32> to vector<32x32xf32>
    %cst_92 = arith.constant dense<0.000000e+00> : vector<2x32xf32>
    %102 = tpu.matmul %99, %101, %cst_92 {dimension_numbers = #tpu.dot_dimension_numbers<[1], [0], [0], [1], [0, 0, 1, 1], [], []>} : vector<2x32xf32>, vector<32x32xf32>, vector<2x32xf32> -> vector<2x32xf32>
    %103 = arith.addf %97, %102 : vector<2x32xf32>
    %104 = vector.extract_strided_slice %96 {offsets = [0, 1, 0], sizes = [2, 1, 32], strides = [1, 1, 1]} : vector<2x4x32xf32> to vector<2x1x32xf32>
    %105 = vector.shape_cast %104 : vector<2x1x32xf32> to vector<2x32xf32>
    %c1_93 = arith.constant 1 : index
    %c0_94 = arith.constant 0 : index
    %c0_95 = arith.constant 0 : index
    %106 = vector.load %arg7[%c1_93, %c0_94, %c0_95] : memref<4x32x32xf32, #tpu.memory_space<vmem>>, vector<1x32x32xf32>
    %107 = vector.shape_cast %106 : vector<1x32x32xf32> to vector<32x32xf32>
    %cst_96 = arith.constant dense<0.000000e+00> : vector<2x32xf32>
    %108 = tpu.matmul %105, %107, %cst_96 {dimension_numbers = #tpu.dot_dimension_numbers<[1], [0], [0], [1], [0, 0, 1, 1], [], []>} : vector<2x32xf32>, vector<32x32xf32>, vector<2x32xf32> -> vector<2x32xf32>
    %109 = arith.addf %103, %108 : vector<2x32xf32>
    %110 = vector.extract_strided_slice %96 {offsets = [0, 2, 0], sizes = [2, 1, 32], strides = [1, 1, 1]} : vector<2x4x32xf32> to vector<2x1x32xf32>
    %111 = vector.shape_cast %110 : vector<2x1x32xf32> to vector<2x32xf32>
    %c2_97 = arith.constant 2 : index
    %c0_98 = arith.constant 0 : index
    %c0_99 = arith.constant 0 : index
    %112 = vector.load %arg7[%c2_97, %c0_98, %c0_99] : memref<4x32x32xf32, #tpu.memory_space<vmem>>, vector<1x32x32xf32>
    %113 = vector.shape_cast %112 : vector<1x32x32xf32> to vector<32x32xf32>
    %cst_100 = arith.constant dense<0.000000e+00> : vector<2x32xf32>
    %114 = tpu.matmul %111, %113, %cst_100 {dimension_numbers = #tpu.dot_dimension_numbers<[1], [0], [0], [1], [0, 0, 1, 1], [], []>} : vector<2x32xf32>, vector<32x32xf32>, vector<2x32xf32> -> vector<2x32xf32>
    %115 = arith.addf %109, %114 : vector<2x32xf32>
    %116 = vector.extract_strided_slice %96 {offsets = [0, 3, 0], sizes = [2, 1, 32], strides = [1, 1, 1]} : vector<2x4x32xf32> to vector<2x1x32xf32>
    %117 = vector.shape_cast %116 : vector<2x1x32xf32> to vector<2x32xf32>
    %c3 = arith.constant 3 : index
    %c0_101 = arith.constant 0 : index
    %c0_102 = arith.constant 0 : index
    %118 = vector.load %arg7[%c3, %c0_101, %c0_102] : memref<4x32x32xf32, #tpu.memory_space<vmem>>, vector<1x32x32xf32>
    %119 = vector.shape_cast %118 : vector<1x32x32xf32> to vector<32x32xf32>
    %cst_103 = arith.constant dense<0.000000e+00> : vector<2x32xf32>
    %120 = tpu.matmul %117, %119, %cst_103 {dimension_numbers = #tpu.dot_dimension_numbers<[1], [0], [0], [1], [0, 0, 1, 1], [], []>} : vector<2x32xf32>, vector<32x32xf32>, vector<2x32xf32> -> vector<2x32xf32>
    %121 = arith.addf %115, %120 : vector<2x32xf32>
    %c0_104 = arith.constant 0 : index
    %c0_105 = arith.constant 0 : index
    %122 = vector.load %arg8[%c0_104, %c0_105] : memref<1x32xf32, #tpu.memory_space<vmem>>, vector<1x32xf32>
    %123 = vector.broadcast %122 : vector<1x32xf32> to vector<2x32xf32>
    %124 = arith.addf %121, %123 : vector<2x32xf32>
    %cst_106 = arith.constant 0.000000e+00 : f32
    %125 = vector.broadcast %cst_106 : f32 to vector<2x32xf32>
    %126 = arith.maximumf %124, %125 : vector<2x32xf32>
    %c0_107 = arith.constant 0 : index
    %c0_108 = arith.constant 0 : index
    %127 = vector.load %arg9[%c0_107, %c0_108] : memref<32x128xf32, #tpu.memory_space<vmem>>, vector<32x128xf32>
    %cst_109 = arith.constant dense<0.000000e+00> : vector<2x128xf32>
    %128 = tpu.matmul %126, %127, %cst_109 {dimension_numbers = #tpu.dot_dimension_numbers<[1], [0], [0], [1], [0, 0, 1, 1], [], []>} : vector<2x32xf32>, vector<32x128xf32>, vector<2x128xf32> -> vector<2x128xf32>
    %c0_110 = arith.constant 0 : index
    %c0_111 = arith.constant 0 : index
    %129 = vector.load %arg10[%c0_110, %c0_111] : memref<1x128xf32, #tpu.memory_space<vmem>>, vector<1x128xf32>
    %130 = vector.broadcast %129 : vector<1x128xf32> to vector<2x128xf32>
    %131 = arith.addf %128, %130 : vector<2x128xf32>
    %c0_112 = arith.constant 0 : index
    %c0_113 = arith.constant 0 : index
    %132 = vector.load %arg11[%c0_112, %c0_113] : memref<2x128xf32, #tpu.memory_space<vmem>>, vector<2x128xf32>
    tpu.vector_store %arg11[%c0_112, %c0_113], %131 {strides = array<i32>} : memref<2x128xf32, #tpu.memory_space<vmem>>, vector<2x128xf32>,
    return
  }
}

</mosaic_0001>

<llo_original>
// kernel: cnn_forward.1
$region0: #{cnn_forward.1}
  #allocation0 [shape = 'u32[]', space=smem, size = 0x4, offset = 0x4, fixed_abs, tag = 'smem constant byte address 0x4 - core index']
  #allocation1 [shape = 'u32[144,128]{1,0:T(1,128)}', space=vmem, size = 0x12000, scoped, tag = 'internal scratch']
  #allocation2 [shape = 'f32[2,18,18]{2,1,0:T(8,128)}', space=vmem, size = 0x6000, scoped, tag = 'scratch operand']
  #allocation3 [shape = 'f32[2,10,40]{2,1,0:T(8,128)}', space=vmem, size = 0x4000, scoped, tag = 'scratch operand']
  %s0 = inlined_call_operand.vmem [shape: f32[2,16,16], index: 0, kind: input, shape index: {}]
  %s1 = inlined_call_operand.vmem [shape: f32[3,18,32], index: 1, kind: input, shape index: {}]
  %s2 = inlined_call_operand.vmem [shape: f32[3,18,32], index: 2, kind: input, shape index: {}]
  %s3 = inlined_call_operand.vmem [shape: f32[1,32], index: 3, kind: input, shape index: {}]
  %s4 = inlined_call_operand.vmem [shape: f32[3,40,32], index: 4, kind: input, shape index: {}]
  %s5 = inlined_call_operand.vmem [shape: f32[3,40,32], index: 5, kind: input, shape index: {}]
  %s6 = inlined_call_operand.vmem [shape: f32[1,32], index: 6, kind: input, shape index: {}]
  %s7 = inlined_call_operand.vmem [shape: f32[4,32,32], index: 7, kind: input, shape index: {}]
  %s8 = inlined_call_operand.vmem [shape: f32[1,32], index: 8, kind: input, shape index: {}]
  %s9 = inlined_call_operand.vmem [shape: f32[32,128], index: 9, kind: input, shape index: {}]
  %s10 = inlined_call_operand.vmem [shape: f32[1,128], index: 10, kind: input, shape index: {}]
  %s11 = inlined_call_operand.hbm [shape: f32[2,128], index: 11, kind: output, shape index: {}]
  %s12 = sld [smem:[#allocation0]]
  $region54: #{cnn_forward.1} parent=0
    _
  %s14 = ssub.s32 1, %s12
  %s15 = scalar_select 0, %s14, %s12
  $region1: #{cnn_forward.1} parent=0
    #allocation4 [shape = 'u8[1024]{0}', space=vmem, size = 0x400, scoped, tag = 'output window, operand 0, single buffered']
    #allocation5 [shape = 's32[1]{0}', space=sflag, size = 0x4, scoped, tag = 'scoped memory for cnn_forward.1']
    %16 = vsyncpa [#allocation5], 0
    // Predicated region
    $region2: #{cnn_forward.1} parent=1 // pred_check
      _
    $region3: #{cnn_forward.1} parent=1 // pred_check_branch
      %18 = sbr.rel (0) target = $region5
    $region4: #{cnn_forward.1} parent=1 // pred_region
      _
    $region5: #{cnn_forward.1} parent=1 // pred_fallthru
      _
    // Predicated region
    $region6: #{cnn_forward.1} parent=1 // pred_check
      _
    $region7: #{cnn_forward.1} parent=1 // pred_check_branch
      %20 = sbr.rel (0) target = $region9
    $region8: #{cnn_forward.1} parent=1 // pred_region
      _
    $region9: #{cnn_forward.1} parent=1 // pred_fallthru
      _
    // Predicated region
    $region10: #{cnn_forward.1} parent=1 // pred_check
      _
    $region11: #{cnn_forward.1} parent=1 // pred_check_branch
      %22 = sbr.rel (0) target = $region13
    $region12: #{cnn_forward.1} parent=1 // pred_region
      _
    $region13: #{cnn_forward.1} parent=1 // pred_fallthru
      _
    // Predicated region
    $region14: #{cnn_forward.1} parent=1 // pred_check
      _
    $region15: #{cnn_forward.1} parent=1 // pred_check_branch
      %24 = sbr.rel (0) target = $region17
    $region16: #{cnn_forward.1} parent=1 // pred_region
      _
    $region17: #{cnn_forward.1} parent=1 // pred_fallthru
      _
    // Predicated region
    $region18: #{cnn_forward.1} parent=1 // pred_check
      _
    $region19: #{cnn_forward.1} parent=1 // pred_check_branch
      %26 = sbr.rel (0) target = $region21
    $region20: #{cnn_forward.1} parent=1 // pred_region
      _
    $region21: #{cnn_forward.1} parent=1 // pred_fallthru
      _
    // Predicated region
    $region22: #{cnn_forward.1} parent=1 // pred_check
      _
    $region23: #{cnn_forward.1} parent=1 // pred_check_branch
      %28 = sbr.rel (0) target = $region25
    $region24: #{cnn_forward.1} parent=1 // pred_region
      _
    $region25: #{cnn_forward.1} parent=1 // pred_fallthru
      _
    // Predicated region
    $region26: #{cnn_forward.1} parent=1 // pred_check
      _
    $region27: #{cnn_forward.1} parent=1 // pred_check_branch
      %30 = sbr.rel (0) target = $region29
    $region28: #{cnn_forward.1} parent=1 // pred_region
      _
    $region29: #{cnn_forward.1} parent=1 // pred_fallthru
      _
    // Predicated region
    $region30: #{cnn_forward.1} parent=1 // pred_check
      _
    $region31: #{cnn_forward.1} parent=1 // pred_check_branch
      %32 = sbr.rel (0) target = $region33
    $region32: #{cnn_forward.1} parent=1 // pred_region
      _
    $region33: #{cnn_forward.1} parent=1 // pred_fallthru
      _
    // Predicated region
    $region34: #{cnn_forward.1} parent=1 // pred_check
      _
    $region35: #{cnn_forward.1} parent=1 // pred_check_branch
      %34 = sbr.rel (0) target = $region37
    $region36: #{cnn_forward.1} parent=1 // pred_region
      _
    $region37: #{cnn_forward.1} parent=1 // pred_fallthru
      _
    // Predicated region
    $region38: #{cnn_forward.1} parent=1 // pred_check
      _
    $region39: #{cnn_forward.1} parent=1 // pred_check_branch
      %36 = sbr.rel (0) target = $region41
    $region40: #{cnn_forward.1} parent=1 // pred_region
      _
    $region41: #{cnn_forward.1} parent=1 // pred_fallthru
      _
    // Predicated region
    $region42: #{cnn_forward.1} parent=1 // pred_check
      _
    $region43: #{cnn_forward.1} parent=1 // pred_check_branch
      %38 = sbr.rel (0) target = $region45
    $region44: #{cnn_forward.1} parent=1 // pred_region
      _
    $region45: #{cnn_forward.1} parent=1 // pred_fallthru
      _
    %vm39 = vcmask 146432
    %40 = vst.msk [vmem:[#allocation2] sm:$0xff] %vm39, 0.0
    %41 = vst.msk [vmem:[#allocation2 + $0x8] sm:$0xff] %vm39, 0.0
    %vm42 = vcmask 140288
    %43 = vst.msk [vmem:[#allocation2 + $0x10] sm:$0x3] %vm42, 0.0
    %44 = vst.msk [vmem:[#allocation2 + $0x18] sm:$0xff] %vm39, 0.0
    %45 = vst.msk [vmem:[#allocation2 + $0x20] sm:$0xff] %vm39, 0.0
    %46 = vst.msk [vmem:[#allocation2 + $0x28] sm:$0x3] %vm42, 0.0
    %v47 = vld [vmem:[%s0] sm:$0xff]
    %v48 = vld [vmem:[%s0 + $0x8] sm:$0xff]
    %v49 = vld [vmem:[%s0 + $0x10] sm:$0xff]
    %v50 = vld [vmem:[%s0 + $0x18] sm:$0xff]
    %55 = vrot.lane.b32.xlu0 %v47, 1
    %v56 = vpop.permute.xlu0 %55
    %57 = vrot.lane.b32.xlu0 %v48, 1
    %v58 = vpop.permute.xlu0 %57
    %59 = vrot.lane.b32.xlu0 %v49, 1
    %v60 = vpop.permute.xlu0 %59
    %61 = vrot.lane.b32.xlu0 %v50, 1
    %v62 = vpop.permute.xlu0 %61
    %vm67 = vcmask 138248
    %68 = vst.msk [vmem:[#allocation2 + $0x1] sm:$0xff] %vm67, %v56
    %69 = vst.msk [vmem:[#allocation2 + $0x9] sm:$0xff] %vm67, %v58
    %70 = vst.msk [vmem:[#allocation2 + $0x19] sm:$0xff] %vm67, %v60
    %71 = vst.msk [vmem:[#allocation2 + $0x21] sm:$0xff] %vm67, %v62
    %v72 = vld [vmem:[#allocation2] sm:$0xff]
    %v73 = vld [vmem:[#allocation2 + $0x8] sm:$0xff]
    %v74 = vld [vmem:[#allocation2 + $0x18] sm:$0xff]
    %v75 = vld [vmem:[#allocation2 + $0x20] sm:$0xff]
    %v76 = vld [vmem:[%s1] sm:$0xff]
    %v77 = vld [vmem:[%s1 + $0x8] sm:$0xff]
    %v78 = vld [vmem:[%s1 + $0x10] sm:$0x3]
    %v79 = vld [vmem:[%s2] sm:$0xff]
    %v80 = vld [vmem:[%s2 + $0x8] sm:$0xff]
    %v81 = vld [vmem:[%s2 + $0x10] sm:$0x3]
    %v82 = vld [vmem:[#allocation2 + $0x1] sm:$0xff]
    %v83 = vld [vmem:[#allocation2 + $0x9] sm:$0xff]
    %v84 = vld [vmem:[#allocation2 + $0x19] sm:$0xff]
    %v85 = vld [vmem:[#allocation2 + $0x21] sm:$0xff]
    %s86 = scalar_lea.vmem %s1, 24
    %v87 = vld [vmem:[%s86] sm:$0xff]
    %v88 = vld [vmem:[%s86 + $0x8] sm:$0xff]
    %v89 = vld [vmem:[%s86 + $0x10] sm:$0x3]
    %v91 = vsel %vm39, %v82, 0
    %v94 = vsel %vm39, %v83, 0
    %v97 = vsel %vm39, %v84, 0
    %v100 = vsel %vm39, %v85, 0
    %vm102 = vcmask 1041408
    %v104 = vsel %vm102, %v89, 0
    %106 = vmatprep.subr.mxu0 0.0
    %107 = vmatpush1.msra.mxu0 %v87
    %108 = vmatprep.subr.mxu0 0.0
    %109 = vmatpush1.msra.mxu0 %v88
    %110 = vmatprep.subr.mxu0 0.0
    %111 = vmatpush1.msra.mxu0 %v104
    %112 = vmatprep.subr.mxu0 0.0
    %113 = vmatpush1.msra.mxu0 0.0
    %114 = vmatprep.subr.mxu0 0.0
    %115 = vmatpush1.msra.mxu0 0.0
    %116 = vmatprep.subr.mxu0 0.0
    %117 = vmatpush1.msra.mxu0 0.0
    %118 = vmatprep.subr.mxu0 0.0
    %119 = vmatpush1.msra.mxu0 0.0
    %120 = vmatprep.subr.mxu0 0.0
    %121 = vmatpush1.msra.mxu0 0.0
    %122 = vmatprep.subr.mxu0 0.0
    %123 = vmatpush1.msra.mxu0 0.0
    %124 = vmatprep.subr.mxu0 0.0
    %125 = vmatpush1.msra.mxu0 0.0
    %126 = vmatprep.subr.mxu0 0.0
    %127 = vmatpush1.msra.mxu0 0.0
    %128 = vmatprep.subr.mxu0 0.0
    %129 = vmatpush1.msra.mxu0 0.0
    %130 = vmatprep.subr.mxu0 0.0
    %131 = vmatpush1.msra.mxu0 0.0
    %132 = vmatprep.subr.mxu0 0.0
    %133 = vmatpush1.msra.mxu0 0.0
    %134 = vmatprep.subr.mxu0 0.0
    %135 = vmatpush1.msra.mxu0 0.0
    %136 = vmatprep.subr.mxu0 0.0
    %137 = vmatpush1.msra.mxu0 0.0
    %138 = vmatprep.subr.mxu0 0.0
    %139 = vmatpush1.msra.mxu0 0.0
    %140 = vmatprep.subr.mxu0 0.0
    %141 = vmatpush1.msra.mxu0 0.0
    %142 = vmatprep.subr.mxu0 0.0
    %143 = vmatpush1.msra.mxu0 0.0
    %144 = vmatprep.subr.mxu0 0.0
    %145 = vmatpush1.msra.mxu0 0.0
    %146 = vmatprep.subr.mxu0 0.0
    %147 = vmatpush1.msra.mxu0 0.0
    %148 = vmatprep.subr.mxu0 0.0
    %149 = vmatpush1.msra.mxu0 0.0
    %150 = vmatprep.subr.mxu0 0.0
    %151 = vmatpush1.msra.mxu0 0.0
    %152 = vmatprep.subr.mxu0 0.0
    %153 = vmatpush1.msra.mxu0 0.0
    %154 = vmatprep.subr.mxu0 0.0
    %155 = vmatpush1.msra.mxu0 0.0
    %156 = vmatprep.subr.mxu0 0.0
    %157 = vmatpush1.msra.mxu0 0.0
    %158 = vmatprep.subr.mxu0 0.0
    %159 = vmatpush1.msra.mxu0 0.0
    %160 = vmatprep.subr.mxu0 0.0
    %161 = vmatpush1.msra.mxu0 0.0
    %162 = vmatprep.subr.mxu0 0.0
    %163 = vmatpush1.msra.mxu0 0.0
    %164 = vmatprep.subr.mxu0 0.0
    %165 = vmatpush1.msra.mxu0 0.0
    %166 = vmatprep.subr.mxu0 0.0
    %167 = vmatpush1.msra.mxu0 0.0
    %168 = vmatprep.subr.mxu0 0.0
    %169 = vmatpush1.msra.mxu0 0.0
    %170 = vmatprep.mubr.f32.mxu0 0.0
    %171 = vmatmul.mubr.f32.gmra.mrb[0].mxu0 %v91
    %v172 = vpop.f32.mrb[0].mxu0
    %v173 = vadd.f32 0.0, %v172
    %v174 = vpop.f32.mrb[0].mxu0
    %175 = vmatprep.mubr.f32.mxu0 0.0
    %176 = vmatmul.mubr.f32.gmra.mrb[0].mxu0 %v94
    %v177 = vpop.f32.mrb[0].mxu0
    %v178 = vadd.f32 0.0, %v177
    %v179 = vpop.f32.mrb[0].mxu0
    %180 = vmatprep.mubr.f32.mxu0 0.0
    %181 = vmatmul.mubr.f32.gmra.mrb[0].mxu0 %v97
    %v182 = vpop.f32.mrb[0].mxu0
    %v183 = vadd.f32 0.0, %v182
    %v184 = vpop.f32.mrb[0].mxu0
    %185 = vmatprep.mubr.f32.mxu0 0.0
    %186 = vmatmul.mubr.f32.gmra.mrb[0].mxu0 %v100
    %v187 = vpop.f32.mrb[0].mxu0
    %v188 = vadd.f32 0.0, %v187
    %v189 = vpop.f32.mrb[0].mxu0
    %190 = vdwg.mxu0
    %v192 = vsel %vm39, %v72, 0
    %v195 = vsel %vm39, %v73, 0
    %v198 = vsel %vm39, %v74, 0
    %v201 = vsel %vm39, %v75, 0
    %v204 = vsel %vm102, %v78, 0
    %206 = vmatprep.subr.mxu0 0.0
    %207 = vmatpush1.msra.mxu0 %v76
    %208 = vmatprep.subr.mxu0 0.0
    %209 = vmatpush1.msra.mxu0 %v77
    %210 = vmatprep.subr.mxu0 0.0
    %211 = vmatpush1.msra.mxu0 %v204
    %212 = vmatprep.subr.mxu0 0.0
    %213 = vmatpush1.msra.mxu0 0.0
    %214 = vmatprep.subr.mxu0 0.0
    %215 = vmatpush1.msra.mxu0 0.0
    %216 = vmatprep.subr.mxu0 0.0
    %217 = vmatpush1.msra.mxu0 0.0
    %218 = vmatprep.subr.mxu0 0.0
    %219 = vmatpush1.msra.mxu0 0.0
    %220 = vmatprep.subr.mxu0 0.0
    %221 = vmatpush1.msra.mxu0 0.0
    %222 = vmatprep.subr.mxu0 0.0
    %223 = vmatpush1.msra.mxu0 0.0
    %224 = vmatprep.subr.mxu0 0.0
    %225 = vmatpush1.msra.mxu0 0.0
    %226 = vmatprep.subr.mxu0 0.0
    %227 = vmatpush1.msra.mxu0 0.0
    %228 = vmatprep.subr.mxu0 0.0
    %229 = vmatpush1.msra.mxu0 0.0
    %230 = vmatprep.subr.mxu0 0.0
    %231 = vmatpush1.msra.mxu0 0.0
    %232 = vmatprep.subr.mxu0 0.0
    %233 = vmatpush1.msra.mxu0 0.0
    %234 = vmatprep.subr.mxu0 0.0
    %235 = vmatpush1.msra.mxu0 0.0
    %236 = vmatprep.subr.mxu0 0.0
    %237 = vmatpush1.msra.mxu0 0.0
    %238 = vmatprep.subr.mxu0 0.0
    %239 = vmatpush1.msra.mxu0 0.0
    %240 = vmatprep.subr.mxu0 0.0
    %241 = vmatpush1.msra.mxu0 0.0
    %242 = vmatprep.subr.mxu0 0.0
    %243 = vmatpush1.msra.mxu0 0.0
    %244 = vmatprep.subr.mxu0 0.0
    %245 = vmatpush1.msra.mxu0 0.0
    %246 = vmatprep.subr.mxu0 0.0
    %247 = vmatpush1.msra.mxu0 0.0
    %248 = vmatprep.subr.mxu0 0.0
    %249 = vmatpush1.msra.mxu0 0.0
    %250 = vmatprep.subr.mxu0 0.0
    %251 = vmatpush1.msra.mxu0 0.0
    %252 = vmatprep.subr.mxu0 0.0
    %253 = vmatpush1.msra.mxu0 0.0
    %254 = vmatprep.subr.mxu0 0.0
    %255 = vmatpush1.msra.mxu0 0.0
    %256 = vmatprep.subr.mxu0 0.0
    %257 = vmatpush1.msra.mxu0 0.0
    %258 = vmatprep.subr.mxu0 0.0
    %259 = vmatpush1.msra.mxu0 0.0
    %260 = vmatprep.subr.mxu0 0.0
    %261 = vmatpush1.msra.mxu0 0.0
    %262 = vmatprep.subr.mxu0 0.0
    %263 = vmatpush1.msra.mxu0 0.0
    %264 = vmatprep.subr.mxu0 0.0
    %265 = vmatpush1.msra.mxu0 0.0
    %266 = vmatprep.subr.mxu0 0.0
    %267 = vmatpush1.msra.mxu0 0.0
    %268 = vmatprep.subr.mxu0 0.0
    %269 = vmatpush1.msra.mxu0 0.0
    %270 = vmatprep.mubr.f32.mxu0 0.0
    %271 = vmatmul.mubr.f32.gmra.mrb[0].mxu0 %v192
    %v272 = vpop.f32.mrb[0].mxu0
    %v273 = vadd.f32 %v173, %v272
    %v274 = vpop.f32.mrb[0].mxu0
    %275 = vmatprep.mubr.f32.mxu0 0.0
    %276 = vmatmul.mubr.f32.gmra.mrb[0].mxu0 %v195
    %v277 = vpop.f32.mrb[0].mxu0
    %v278 = vadd.f32 %v178, %v277
    %v279 = vpop.f32.mrb[0].mxu0
    %280 = vmatprep.mubr.f32.mxu0 0.0
    %281 = vmatmul.mubr.f32.gmra.mrb[0].mxu0 %v198
    %v282 = vpop.f32.mrb[0].mxu0
    %v283 = vadd.f32 %v183, %v282
    %v284 = vpop.f32.mrb[0].mxu0
    %285 = vmatprep.mubr.f32.mxu0 0.0
    %286 = vmatmul.mubr.f32.gmra.mrb[0].mxu0 %v201
    %v287 = vpop.f32.mrb[0].mxu0
    %v288 = vadd.f32 %v188, %v287
    %v289 = vpop.f32.mrb[0].mxu0
    %290 = vdwg.mxu0
    %s291 = scalar_lea.vmem %s2, 24
    %v292 = vld [vmem:[%s291] sm:$0xff]
    %v293 = vld [vmem:[%s291 + $0x8] sm:$0xff]
    %v294 = vld [vmem:[%s291 + $0x10] sm:$0x3]
    %v296 = vsel %vm102, %v294, 0
    %298 = vmatprep.subr.mxu0 0.0
    %299 = vmatpush1.msra.mxu0 %v292
    %300 = vmatprep.subr.mxu0 0.0
    %301 = vmatpush1.msra.mxu0 %v293
    %302 = vmatprep.subr.mxu0 0.0
    %303 = vmatpush1.msra.mxu0 %v296
    %304 = vmatprep.subr.mxu0 0.0
    %305 = vmatpush1.msra.mxu0 0.0
    %306 = vmatprep.subr.mxu0 0.0
    %307 = vmatpush1.msra.mxu0 0.0
    %308 = vmatprep.subr.mxu0 0.0
    %309 = vmatpush1.msra.mxu0 0.0
    %310 = vmatprep.subr.mxu0 0.0
    %311 = vmatpush1.msra.mxu0 0.0
    %312 = vmatprep.subr.mxu0 0.0
    %313 = vmatpush1.msra.mxu0 0.0
    %314 = vmatprep.subr.mxu0 0.0
    %315 = vmatpush1.msra.mxu0 0.0
    %316 = vmatprep.subr.mxu0 0.0
    %317 = vmatpush1.msra.mxu0 0.0
    %318 = vmatprep.subr.mxu0 0.0
    %319 = vmatpush1.msra.mxu0 0.0
    %320 = vmatprep.subr.mxu0 0.0
    %321 = vmatpush1.msra.mxu0 0.0
    %322 = vmatprep.subr.mxu0 0.0
    %323 = vmatpush1.msra.mxu0 0.0
    %324 = vmatprep.subr.mxu0 0.0
    %325 = vmatpush1.msra.mxu0 0.0
    %326 = vmatprep.subr.mxu0 0.0
    %327 = vmatpush1.msra.mxu0 0.0
    %328 = vmatprep.subr.mxu0 0.0
    %329 = vmatpush1.msra.mxu0 0.0
    %330 = vmatprep.subr.mxu0 0.0
    %331 = vmatpush1.msra.mxu0 0.0
    %332 = vmatprep.subr.mxu0 0.0
    %333 = vmatpush1.msra.mxu0 0.0
    %334 = vmatprep.subr.mxu0 0.0
    %335 = vmatpush1.msra.mxu0 0.0
    %336 = vmatprep.subr.mxu0 0.0
    %337 = vmatpush1.msra.mxu0 0.0
    %338 = vmatprep.subr.mxu0 0.0
    %339 = vmatpush1.msra.mxu0 0.0
    %340 = vmatprep.subr.mxu0 0.0
    %341 = vmatpush1.msra.mxu0 0.0
    %342 = vmatprep.subr.mxu0 0.0
    %343 = vmatpush1.msra.mxu0 0.0
    %344 = vmatprep.subr.mxu0 0.0
    %345 = vmatpush1.msra.mxu0 0.0
    %346 = vmatprep.subr.mxu0 0.0
    %347 = vmatpush1.msra.mxu0 0.0
    %348 = vmatprep.subr.mxu0 0.0
    %349 = vmatpush1.msra.mxu0 0.0
    %350 = vmatprep.subr.mxu0 0.0
    %351 = vmatpush1.msra.mxu0 0.0
    %352 = vmatprep.subr.mxu0 0.0
    %353 = vmatpush1.msra.mxu0 0.0
    %354 = vmatprep.subr.mxu0 0.0
    %355 = vmatpush1.msra.mxu0 0.0
    %356 = vmatprep.subr.mxu0 0.0
    %357 = vmatpush1.msra.mxu0 0.0
    %358 = vmatprep.subr.mxu0 0.0
    %359 = vmatpush1.msra.mxu0 0.0
    %360 = vmatprep.subr.mxu0 0.0
    %361 = vmatpush1.msra.mxu0 0.0
    %362 = vmatprep.mubr.f32.mxu0 0.0
    %363 = vmatmul.mubr.f32.gmra.mrb[0].mxu0 %v91
    %v364 = vpop.f32.mrb[0].mxu0
    %v365 = vadd.f32 0.0, %v364
    %v366 = vpop.f32.mrb[0].mxu0
    %367 = vmatprep.mubr.f32.mxu0 0.0
    %368 = vmatmul.mubr.f32.gmra.mrb[0].mxu0 %v94
    %v369 = vpop.f32.mrb[0].mxu0
    %v370 = vadd.f32 0.0, %v369
    %v371 = vpop.f32.mrb[0].mxu0
    %372 = vmatprep.mubr.f32.mxu0 0.0
    %373 = vmatmul.mubr.f32.gmra.mrb[0].mxu0 %v97
    %v374 = vpop.f32.mrb[0].mxu0
    %v375 = vadd.f32 0.0, %v374
    %v376 = vpop.f32.mrb[0].mxu0
    %377 = vmatprep.mubr.f32.mxu0 0.0
    %378 = vmatmul.mubr.f32.gmra.mrb[0].mxu0 %v100
    %v379 = vpop.f32.mrb[0].mxu0
    %v380 = vadd.f32 0.0, %v379
    %v381 = vpop.f32.mrb[0].mxu0
    %382 = vdwg.mxu0
    %v384 = vsel %vm102, %v81, 0
    %386 = vmatprep.subr.mxu0 0.0
    %387 = vmatpush1.msra.mxu0 %v79
    %388 = vmatprep.subr.mxu0 0.0
    %389 = vmatpush1.msra.mxu0 %v80
    %390 = vmatprep.subr.mxu0 0.0
    %391 = vmatpush1.msra.mxu0 %v384
    %392 = vmatprep.subr.mxu0 0.0
    %393 = vmatpush1.msra.mxu0 0.0
    %394 = vmatprep.subr.mxu0 0.0
    %395 = vmatpush1.msra.mxu0 0.0
    %396 = vmatprep.subr.mxu0 0.0
    %397 = vmatpush1.msra.mxu0 0.0
    %398 = vmatprep.subr.mxu0 0.0
    %399 = vmatpush1.msra.mxu0 0.0
    %400 = vmatprep.subr.mxu0 0.0
    %401 = vmatpush1.msra.mxu0 0.0
    %402 = vmatprep.subr.mxu0 0.0
    %403 = vmatpush1.msra.mxu0 0.0
    %404 = vmatprep.subr.mxu0 0.0
    %405 = vmatpush1.msra.mxu0 0.0
    %406 = vmatprep.subr.mxu0 0.0
    %407 = vmatpush1.msra.mxu0 0.0
    %408 = vmatprep.subr.mxu0 0.0
    %409 = vmatpush1.msra.mxu0 0.0
    %410 = vmatprep.subr.mxu0 0.0
    %411 = vmatpush1.msra.mxu0 0.0
    %412 = vmatprep.subr.mxu0 0.0
    %413 = vmatpush1.msra.mxu0 0.0
    %414 = vmatprep.subr.mxu0 0.0
    %415 = vmatpush1.msra.mxu0 0.0
    %416 = vmatprep.subr.mxu0 0.0
    %417 = vmatpush1.msra.mxu0 0.0
    %418 = vmatprep.subr.mxu0 0.0
    %419 = vmatpush1.msra.mxu0 0.0
    %420 = vmatprep.subr.mxu0 0.0
    %421 = vmatpush1.msra.mxu0 0.0
    %422 = vmatprep.subr.mxu0 0.0
    %423 = vmatpush1.msra.mxu0 0.0
    %424 = vmatprep.subr.mxu0 0.0
    %425 = vmatpush1.msra.mxu0 0.0
    %426 = vmatprep.subr.mxu0 0.0
    %427 = vmatpush1.msra.mxu0 0.0
    %428 = vmatprep.subr.mxu0 0.0
    %429 = vmatpush1.msra.mxu0 0.0
    %430 = vmatprep.subr.mxu0 0.0
    %431 = vmatpush1.msra.mxu0 0.0
    %432 = vmatprep.subr.mxu0 0.0
    %433 = vmatpush1.msra.mxu0 0.0
    %434 = vmatprep.subr.mxu0 0.0
    %435 = vmatpush1.msra.mxu0 0.0
    %436 = vmatprep.subr.mxu0 0.0
    %437 = vmatpush1.msra.mxu0 0.0
    %438 = vmatprep.subr.mxu0 0.0
    %439 = vmatpush1.msra.mxu0 0.0
    %440 = vmatprep.subr.mxu0 0.0
    %441 = vmatpush1.msra.mxu0 0.0
    %442 = vmatprep.subr.mxu0 0.0
    %443 = vmatpush1.msra.mxu0 0.0
    %444 = vmatprep.subr.mxu0 0.0
    %445 = vmatpush1.msra.mxu0 0.0
    %446 = vmatprep.subr.mxu0 0.0
    %447 = vmatpush1.msra.mxu0 0.0
    %448 = vmatprep.subr.mxu0 0.0
    %449 = vmatpush1.msra.mxu0 0.0
    %450 = vmatprep.mubr.f32.mxu0 0.0
    %451 = vmatmul.mubr.f32.gmra.mrb[0].mxu0 %v192
    %v452 = vpop.f32.mrb[0].mxu0
    %v453 = vadd.f32 %v365, %v452
    %v454 = vpop.f32.mrb[0].mxu0
    %455 = vmatprep.mubr.f32.mxu0 0.0
    %456 = vmatmul.mubr.f32.gmra.mrb[0].mxu0 %v195
    %v457 = vpop.f32.mrb[0].mxu0
    %v458 = vadd.f32 %v370, %v457
    %v459 = vpop.f32.mrb[0].mxu0
    %460 = vmatprep.mubr.f32.mxu0 0.0
    %461 = vmatmul.mubr.f32.gmra.mrb[0].mxu0 %v198
    %v462 = vpop.f32.mrb[0].mxu0
    %v463 = vadd.f32 %v375, %v462
    %v464 = vpop.f32.mrb[0].mxu0
    %465 = vmatprep.mubr.f32.mxu0 0.0
    %466 = vmatmul.mubr.f32.gmra.mrb[0].mxu0 %v201
    %v467 = vpop.f32.mrb[0].mxu0
    %v468 = vadd.f32 %v380, %v467
    %v469 = vpop.f32.mrb[0].mxu0
    %470 = vdwg.mxu0
    %v471 = vld [vmem:[#allocation2 + $0x2] sm:$0xff]
    %v472 = vld [vmem:[#allocation2 + $0xa] sm:$0xff]
    %v473 = vld [vmem:[#allocation2 + $0x1a] sm:$0xff]
    %v474 = vld [vmem:[#allocation2 + $0x22] sm:$0xff]
    %s475 = scalar_lea.vmem %s1, 48
    %v476 = vld [vmem:[%s475] sm:$0xff]
    %v477 = vld [vmem:[%s475 + $0x8] sm:$0xff]
    %v478 = vld [vmem:[%s475 + $0x10] sm:$0x3]
    %v480 = vsel %vm39, %v471, 0
    %v483 = vsel %vm39, %v472, 0
    %v486 = vsel %vm39, %v473, 0
    %v489 = vsel %vm39, %v474, 0
    %v492 = vsel %vm102, %v478, 0
    %494 = vmatprep.subr.mxu0 0.0
    %495 = vmatpush1.msra.mxu0 %v476
    %496 = vmatprep.subr.mxu0 0.0
    %497 = vmatpush1.msra.mxu0 %v477
    %498 = vmatprep.subr.mxu0 0.0
    %499 = vmatpush1.msra.mxu0 %v492
    %500 = vmatprep.subr.mxu0 0.0
    %501 = vmatpush1.msra.mxu0 0.0
    %502 = vmatprep.subr.mxu0 0.0
    %503 = vmatpush1.msra.mxu0 0.0
    %504 = vmatprep.subr.mxu0 0.0
    %505 = vmatpush1.msra.mxu0 0.0
    %506 = vmatprep.subr.mxu0 0.0
    %507 = vmatpush1.msra.mxu0 0.0
    %508 = vmatprep.subr.mxu0 0.0
    %509 = vmatpush1.msra.mxu0 0.0
    %510 = vmatprep.subr.mxu0 0.0
    %511 = vmatpush1.msra.mxu0 0.0
    %512 = vmatprep.subr.mxu0 0.0
    %513 = vmatpush1.msra.mxu0 0.0
    %514 = vmatprep.subr.mxu0 0.0
    %515 = vmatpush1.msra.mxu0 0.0
    %516 = vmatprep.subr.mxu0 0.0
    %517 = vmatpush1.msra.mxu0 0.0
    %518 = vmatprep.subr.mxu0 0.0
    %519 = vmatpush1.msra.mxu0 0.0
    %520 = vmatprep.subr.mxu0 0.0
    %521 = vmatpush1.msra.mxu0 0.0
    %522 = vmatprep.subr.mxu0 0.0
    %523 = vmatpush1.msra.mxu0 0.0
    %524 = vmatprep.subr.mxu0 0.0
    %525 = vmatpush1.msra.mxu0 0.0
    %526 = vmatprep.subr.mxu0 0.0
    %527 = vmatpush1.msra.mxu0 0.0
    %528 = vmatprep.subr.mxu0 0.0
    %529 = vmatpush1.msra.mxu0 0.0
    %530 = vmatprep.subr.mxu0 0.0
    %531 = vmatpush1.msra.mxu0 0.0
    %532 = vmatprep.subr.mxu0 0.0
    %533 = vmatpush1.msra.mxu0 0.0
    %534 = vmatprep.subr.mxu0 0.0
    %535 = vmatpush1.msra.mxu0 0.0
    %536 = vmatprep.subr.mxu0 0.0
    %537 = vmatpush1.msra.mxu0 0.0
    %538 = vmatprep.subr.mxu0 0.0
    %539 = vmatpush1.msra.mxu0 0.0
    %540 = vmatprep.subr.mxu0 0.0
    %541 = vmatpush1.msra.mxu0 0.0
    %542 = vmatprep.subr.mxu0 0.0
    %543 = vmatpush1.msra.mxu0 0.0
    %544 = vmatprep.subr.mxu0 0.0
    %545 = vmatpush1.msra.mxu0 0.0
    %546 = vmatprep.subr.mxu0 0.0
    %547 = vmatpush1.msra.mxu0 0.0
    %548 = vmatprep.subr.mxu0 0.0
    %549 = vmatpush1.msra.mxu0 0.0
    %550 = vmatprep.subr.mxu0 0.0
    %551 = vmatpush1.msra.mxu0 0.0
    %552 = vmatprep.subr.mxu0 0.0
    %553 = vmatpush1.msra.mxu0 0.0
    %554 = vmatprep.subr.mxu0 0.0
    %555 = vmatpush1.msra.mxu0 0.0
    %556 = vmatprep.subr.mxu0 0.0
    %557 = vmatpush1.msra.mxu0 0.0
    %558 = vmatprep.mubr.f32.mxu0 0.0
    %559 = vmatmul.mubr.f32.gmra.mrb[0].mxu0 %v480
    %v560 = vpop.f32.mrb[0].mxu0
    %v561 = vadd.f32 0.0, %v560
    %v562 = vpop.f32.mrb[0].mxu0
    %563 = vmatprep.mubr.f32.mxu0 0.0
    %564 = vmatmul.mubr.f32.gmra.mrb[0].mxu0 %v483
    %v565 = vpop.f32.mrb[0].mxu0
    %v566 = vadd.f32 0.0, %v565
    %v567 = vpop.f32.mrb[0].mxu0
    %568 = vmatprep.mubr.f32.mxu0 0.0
    %569 = vmatmul.mubr.f32.gmra.mrb[0].mxu0 %v486
    %v570 = vpop.f32.mrb[0].mxu0
    %v571 = vadd.f32 0.0, %v570
    %v572 = vpop.f32.mrb[0].mxu0
    %573 = vmatprep.mubr.f32.mxu0 0.0
    %574 = vmatmul.mubr.f32.gmra.mrb[0].mxu0 %v489
    %v575 = vpop.f32.mrb[0].mxu0
    %v576 = vadd.f32 0.0, %v575
    %v577 = vpop.f32.mrb[0].mxu0
    %578 = vdwg.mxu0
    %v579 = vadd.f32 %v273, %v561
    %v580 = vadd.f32 %v278, %v566
    %v581 = vadd.f32 %v283, %v571
    %v582 = vadd.f32 %v288, %v576
    %s583 = scalar_lea.vmem %s2, 48
    %v584 = vld [vmem:[%s583] sm:$0xff]
    %v585 = vld [vmem:[%s583 + $0x8] sm:$0xff]
    %v586 = vld [vmem:[%s583 + $0x10] sm:$0x3]
    %v588 = vsel %vm102, %v586, 0
    %590 = vmatprep.subr.mxu0 0.0
    %591 = vmatpush1.msra.mxu0 %v584
    %592 = vmatprep.subr.mxu0 0.0
    %593 = vmatpush1.msra.mxu0 %v585
    %594 = vmatprep.subr.mxu0 0.0
    %595 = vmatpush1.msra.mxu0 %v588
    %596 = vmatprep.subr.mxu0 0.0
    %597 = vmatpush1.msra.mxu0 0.0
    %598 = vmatprep.subr.mxu0 0.0
    %599 = vmatpush1.msra.mxu0 0.0
    %600 = vmatprep.subr.mxu0 0.0
    %601 = vmatpush1.msra.mxu0 0.0
    %602 = vmatprep.subr.mxu0 0.0
    %603 = vmatpush1.msra.mxu0 0.0
    %604 = vmatprep.subr.mxu0 0.0
    %605 = vmatpush1.msra.mxu0 0.0
    %606 = vmatprep.subr.mxu0 0.0
    %607 = vmatpush1.msra.mxu0 0.0
    %608 = vmatprep.subr.mxu0 0.0
    %609 = vmatpush1.msra.mxu0 0.0
    %610 = vmatprep.subr.mxu0 0.0
    %611 = vmatpush1.msra.mxu0 0.0
    %612 = vmatprep.subr.mxu0 0.0
    %613 = vmatpush1.msra.mxu0 0.0
    %614 = vmatprep.subr.mxu0 0.0
    %615 = vmatpush1.msra.mxu0 0.0
    %616 = vmatprep.subr.mxu0 0.0
    %617 = vmatpush1.msra.mxu0 0.0
    %618 = vmatprep.subr.mxu0 0.0
    %619 = vmatpush1.msra.mxu0 0.0
    %620 = vmatprep.subr.mxu0 0.0
    %621 = vmatpush1.msra.mxu0 0.0
    %622 = vmatprep.subr.mxu0 0.0
    %623 = vmatpush1.msra.mxu0 0.0
    %624 = vmatprep.subr.mxu0 0.0
    %625 = vmatpush1.msra.mxu0 0.0
    %626 = vmatprep.subr.mxu0 0.0
    %627 = vmatpush1.msra.mxu0 0.0
    %628 = vmatprep.subr.mxu0 0.0
    %629 = vmatpush1.msra.mxu0 0.0
    %630 = vmatprep.subr.mxu0 0.0
    %631 = vmatpush1.msra.mxu0 0.0
    %632 = vmatprep.subr.mxu0 0.0
    %633 = vmatpush1.msra.mxu0 0.0
    %634 = vmatprep.subr.mxu0 0.0
    %635 = vmatpush1.msra.mxu0 0.0
    %636 = vmatprep.subr.mxu0 0.0
    %637 = vmatpush1.msra.mxu0 0.0
    %638 = vmatprep.subr.mxu0 0.0
    %639 = vmatpush1.msra.mxu0 0.0
    %640 = vmatprep.subr.mxu0 0.0
    %641 = vmatpush1.msra.mxu0 0.0
    %642 = vmatprep.subr.mxu0 0.0
    %643 = vmatpush1.msra.mxu0 0.0
    %644 = vmatprep.subr.mxu0 0.0
    %645 = vmatpush1.msra.mxu0 0.0
    %646 = vmatprep.subr.mxu0 0.0
    %647 = vmatpush1.msra.mxu0 0.0
    %648 = vmatprep.subr.mxu0 0.0
    %649 = vmatpush1.msra.mxu0 0.0
    %650 = vmatprep.subr.mxu0 0.0
    %651 = vmatpush1.msra.mxu0 0.0
    %652 = vmatprep.subr.mxu0 0.0
    %653 = vmatpush1.msra.mxu0 0.0
    %654 = vmatprep.mubr.f32.mxu0 0.0
    %655 = vmatmul.mubr.f32.gmra.mrb[0].mxu0 %v480
    %v656 = vpop.f32.mrb[0].mxu0
    %v657 = vadd.f32 0.0, %v656
    %v658 = vpop.f32.mrb[0].mxu0
    %659 = vmatprep.mubr.f32.mxu0 0.0
    %660 = vmatmul.mubr.f32.gmra.mrb[0].mxu0 %v483
    %v661 = vpop.f32.mrb[0].mxu0
    %v662 = vadd.f32 0.0, %v661
    %v663 = vpop.f32.mrb[0].mxu0
    %664 = vmatprep.mubr.f32.mxu0 0.0
    %665 = vmatmul.mubr.f32.gmra.mrb[0].mxu0 %v486
    %v666 = vpop.f32.mrb[0].mxu0
    %v667 = vadd.f32 0.0, %v666
    %v668 = vpop.f32.mrb[0].mxu0
    %669 = vmatprep.mubr.f32.mxu0 0.0
    %670 = vmatmul.mubr.f32.gmra.mrb[0].mxu0 %v489
    %v671 = vpop.f32.mrb[0].mxu0
    %v672 = vadd.f32 0.0, %v671
    %v673 = vpop.f32.mrb[0].mxu0
    %674 = vdwg.mxu0
    %v675 = vadd.f32 %v453, %v657
    %v676 = vadd.f32 %v458, %v662
    %v677 = vadd.f32 %v463, %v667
    %v678 = vadd.f32 %v468, %v672
    %v679 = vmax.f32 %v579, %v675
    %v680 = vmax.f32 %v580, %v676
    %v681 = vmax.f32 %v581, %v677
    %v682 = vmax.f32 %v582, %v678
    %v687 = vcombine.high %v679, %v679
    %v689 = vunpack.c.l.s4 1983009808
    %v690 = vunpack.c.0.s8 %v689
    %v691 = vlaneseq
    %v692 = vshrl.u32 %v691, 7
    %v693 = vsub.s32 %v690, %v692
    %v694 = vrot.slane %v679, %v693
    %v696 = vunpack.c.l.s4 1983009808
    %v697 = vunpack.c.0.s8 %v696
    %v698 = vlaneseq
    %v699 = vshrl.u32 %v698, 7
    %v700 = vsub.s32 %v697, %v699
    %v701 = vrot.slane %v687, %v700
    %v702 = vcombine.high %v694, %v694
    %v703 = vcombine.high %v701, %v701
    %v704 = vcombine.high %v680, %v680
    %v706 = vunpack.c.l.s4 1983009808
    %v707 = vunpack.c.0.s8 %v706
    %v708 = vlaneseq
    %v709 = vshrl.u32 %v708, 7
    %v710 = vsub.s32 %v707, %v709
    %v711 = vrot.slane %v680, %v710
    %v713 = vunpack.c.l.s4 1983009808
    %v714 = vunpack.c.0.s8 %v713
    %v715 = vlaneseq
    %v716 = vshrl.u32 %v715, 7
    %v717 = vsub.s32 %v714, %v716
    %v718 = vrot.slane %v704, %v717
    %v719 = vcombine.high %v711, %v711
    %v720 = vcombine.high %v718, %v718
    %v721 = vcombine.high %v681, %v681
    %v723 = vunpack.c.l.s4 1983009808
    %v724 = vunpack.c.0.s8 %v723
    %v725 = vlaneseq
    %v726 = vshrl.u32 %v725, 7
    %v727 = vsub.s32 %v724, %v726
    %v728 = vrot.slane %v681, %v727
    %v730 = vunpack.c.l.s4 1983009808
    %v731 = vunpack.c.0.s8 %v730
    %v732 = vlaneseq
    %v733 = vshrl.u32 %v732, 7
    %v734 = vsub.s32 %v731, %v733
    %v735 = vrot.slane %v721, %v734
    %v736 = vcombine.high %v728, %v728
    %v737 = vcombine.high %v735, %v735
    %v738 = vcombine.high %v682, %v682
    %v740 = vunpack.c.l.s4 1983009808
    %v741 = vunpack.c.0.s8 %v740
    %v742 = vlaneseq
    %v743 = vshrl.u32 %v742, 7
    %v744 = vsub.s32 %v741, %v743
    %v745 = vrot.slane %v682, %v744
    %v747 = vunpack.c.l.s4 1983009808
    %v748 = vunpack.c.0.s8 %v747
    %v749 = vlaneseq
    %v750 = vshrl.u32 %v749, 7
    %v751 = vsub.s32 %v748, %v750
    %v752 = vrot.slane %v738, %v751
    %v753 = vcombine.high %v745, %v745
    %v754 = vcombine.high %v752, %v752
    %v771 = vrot.slane %v694, 7
    %v772 = vrot.slane %v771, 2
    %v773 = vrot.slane %v702, 7
    %v774 = vrot.slane %v773, 2
    %v775 = vrot.slane %v701, 7
    %v776 = vrot.slane %v775, 2
    %v777 = vrot.slane %v703, 7
    %v778 = vrot.slane %v777, 2
    %v779 = vrot.slane %v711, 7
    %v780 = vrot.slane %v779, 2
    %v781 = vrot.slane %v719, 7
    %v782 = vrot.slane %v781, 2
    %v783 = vrot.slane %v718, 7
    %v784 = vrot.slane %v783, 2
    %v785 = vrot.slane %v720, 7
    %v786 = vrot.slane %v785, 2
    %v787 = vrot.slane %v728, 7
    %v788 = vrot.slane %v787, 2
    %v789 = vrot.slane %v736, 7
    %v790 = vrot.slane %v789, 2
    %v791 = vrot.slane %v735, 7
    %v792 = vrot.slane %v791, 2
    %v793 = vrot.slane %v737, 7
    %v794 = vrot.slane %v793, 2
    %v795 = vrot.slane %v745, 7
    %v796 = vrot.slane %v795, 2
    %v797 = vrot.slane %v753, 7
    %v798 = vrot.slane %v797, 2
    %v799 = vrot.slane %v752, 7
    %v800 = vrot.slane %v799, 2
    %v801 = vrot.slane %v754, 7
    %v802 = vrot.slane %v801, 2
    %v819 = vmax.f32 %v694, %v772
    %v820 = vmax.f32 %v702, %v774
    %v821 = vmax.f32 %v701, %v776
    %v822 = vmax.f32 %v703, %v778
    %v823 = vmax.f32 %v711, %v780
    %v824 = vmax.f32 %v719, %v782
    %v825 = vmax.f32 %v718, %v784
    %v826 = vmax.f32 %v720, %v786
    %v827 = vmax.f32 %v728, %v788
    %v828 = vmax.f32 %v736, %v790
    %v829 = vmax.f32 %v735, %v792
    %v830 = vmax.f32 %v737, %v794
    %v831 = vmax.f32 %v745, %v796
    %v832 = vmax.f32 %v753, %v798
    %v833 = vmax.f32 %v752, %v800
    %v834 = vmax.f32 %v754, %v802
    %v835 = vld [vmem:[%s3] sm:$0x1]
    %v837 = vlaneseq
    %v838 = vshrl.u32 %v837, 7
    %v839 = vsub.s32 0, %v838
    %v840 = vrot.slane %v835, %v839
    %v841 = vcombine.high %v840, %v840
    %v843 = vunpack.c.l.s4 1983009808
    %v844 = vunpack.c.0.s8 %v843
    %v845 = vlaneseq
    %v846 = vshrl.u32 %v845, 7
    %v847 = vsub.s32 %v844, %v846
    %v848 = vrot.slane %v840, %v847
    %v850 = vunpack.c.l.s4 1983009808
    %v851 = vunpack.c.0.s8 %v850
    %v852 = vlaneseq
    %v853 = vshrl.u32 %v852, 7
    %v854 = vsub.s32 %v851, %v853
    %v855 = vrot.slane %v841, %v854
    %v856 = vcombine.high %v848, %v848
    %v857 = vcombine.high %v855, %v855
    %v858 = vrot.slane %v848, 1
    %v859 = vrot.slane %v856, 1
    %v860 = vrot.slane %v855, 1
    %v861 = vrot.slane %v857, 1
    %v870 = vadd.f32 %v819, %v848
    %v871 = vadd.f32 %v820, %v858
    %v872 = vadd.f32 %v821, %v856
    %v873 = vadd.f32 %v822, %v859
    %v874 = vadd.f32 %v823, %v855
    %v875 = vadd.f32 %v824, %v860
    %v876 = vadd.f32 %v825, %v857
    %v877 = vadd.f32 %v826, %v861
    %v878 = vadd.f32 %v827, %v848
    %v879 = vadd.f32 %v828, %v858
    %v880 = vadd.f32 %v829, %v856
    %v881 = vadd.f32 %v830, %v859
    %v882 = vadd.f32 %v831, %v855
    %v883 = vadd.f32 %v832, %v860
    %v884 = vadd.f32 %v833, %v857
    %v885 = vadd.f32 %v834, %v861
    %v886 = vmax.f32 %v870, 0.0
    %v887 = vmax.f32 %v871, 0.0
    %v888 = vmax.f32 %v872, 0.0
    %v889 = vmax.f32 %v873, 0.0
    %v890 = vmax.f32 %v874, 0.0
    %v891 = vmax.f32 %v875, 0.0
    %v892 = vmax.f32 %v876, 0.0
    %v893 = vmax.f32 %v877, 0.0
    %v894 = vmax.f32 %v878, 0.0
    %v895 = vmax.f32 %v879, 0.0
    %v896 = vmax.f32 %v880, 0.0
    %v897 = vmax.f32 %v881, 0.0
    %v898 = vmax.f32 %v882, 0.0
    %v899 = vmax.f32 %v883, 0.0
    %v900 = vmax.f32 %v884, 0.0
    %v901 = vmax.f32 %v885, 0.0
    %vm902 = vcmask 326656
    %903 = vst.msk [vmem:[#allocation3] sm:$0xff] %vm902, 0.0
    %vm904 = vcmask 320512
    %905 = vst.msk [vmem:[#allocation3 + $0x8] sm:$0x3] %vm904, 0.0
    %906 = vst.msk [vmem:[#allocation3 + $0x10] sm:$0xff] %vm902, 0.0
    %907 = vst.msk [vmem:[#allocation3 + $0x18] sm:$0x3] %vm904, 0.0
    %v924 = vlaneseq
    %v925 = vshrl.u32 %v924, 7
    %v926 = vsub.s32 0, %v925
    %v927 = vrot.slane %v886, %v926
    %v928 = vlaneseq
    %v929 = vshrl.u32 %v928, 7
    %v930 = vsub.s32 0, %v929
    %v931 = vrot.slane %v887, %v930
    %v932 = vlaneseq
    %v933 = vshrl.u32 %v932, 7
    %v934 = vsub.s32 0, %v933
    %v935 = vrot.slane %v888, %v934
    %v936 = vlaneseq
    %v937 = vshrl.u32 %v936, 7
    %v938 = vsub.s32 0, %v937
    %v939 = vrot.slane %v889, %v938
    %v940 = vlaneseq
    %v941 = vshrl.u32 %v940, 7
    %v942 = vsub.s32 0, %v941
    %v943 = vrot.slane %v890, %v942
    %v944 = vlaneseq
    %v945 = vshrl.u32 %v944, 7
    %v946 = vsub.s32 0, %v945
    %v947 = vrot.slane %v891, %v946
    %v948 = vlaneseq
    %v949 = vshrl.u32 %v948, 7
    %v950 = vsub.s32 0, %v949
    %v951 = vrot.slane %v892, %v950
    %v952 = vlaneseq
    %v953 = vshrl.u32 %v952, 7
    %v954 = vsub.s32 0, %v953
    %v955 = vrot.slane %v893, %v954
    %v956 = vlaneseq
    %v957 = vshrl.u32 %v956, 7
    %v958 = vsub.s32 0, %v957
    %v959 = vrot.slane %v894, %v958
    %v960 = vlaneseq
    %v961 = vshrl.u32 %v960, 7
    %v962 = vsub.s32 0, %v961
    %v963 = vrot.slane %v895, %v962
    %v964 = vlaneseq
    %v965 = vshrl.u32 %v964, 7
    %v966 = vsub.s32 0, %v965
    %v967 = vrot.slane %v896, %v966
    %v968 = vlaneseq
    %v969 = vshrl.u32 %v968, 7
    %v970 = vsub.s32 0, %v969
    %v971 = vrot.slane %v897, %v970
    %v972 = vlaneseq
    %v973 = vshrl.u32 %v972, 7
    %v974 = vsub.s32 0, %v973
    %v975 = vrot.slane %v898, %v974
    %v976 = vlaneseq
    %v977 = vshrl.u32 %v976, 7
    %v978 = vsub.s32 0, %v977
    %v979 = vrot.slane %v899, %v978
    %v980 = vlaneseq
    %v981 = vshrl.u32 %v980, 7
    %v982 = vsub.s32 0, %v981
    %v983 = vrot.slane %v900, %v982
    %v984 = vlaneseq
    %v985 = vshrl.u32 %v984, 7
    %v986 = vsub.s32 0, %v985
    %v987 = vrot.slane %v901, %v986
    %vm988 = vcmask 1041409
    %v989 = vsel %vm988, %v931, %v927
    %vm990 = vcmask 1042434
    %v991 = vsel %vm990, %v935, %v989
    %vm992 = vcmask 1043459
    %v993 = vsel %vm992, %v939, %v991
    %vm994 = vcmask 1044484
    %v995 = vsel %vm994, %v943, %v993
    %vm996 = vcmask 1045509
    %v997 = vsel %vm996, %v947, %v995
    %vm998 = vcmask 1046534
    %v999 = vsel %vm998, %v951, %v997
    %vm1000 = vcmask 1047559
    %v1001 = vsel %vm1000, %v955, %v999
    %v1002 = vsel %vm988, %v963, %v959
    %v1003 = vsel %vm990, %v967, %v1002
    %v1004 = vsel %vm992, %v971, %v1003
    %v1005 = vsel %vm994, %v975, %v1004
    %v1006 = vsel %vm996, %v979, %v1005
    %v1007 = vsel %vm998, %v983, %v1006
    %v1008 = vsel %vm1000, %v987, %v1007
    %1009 = vrot.lane.b32.xlu0 %v1001, 4
    %v1010 = vpop.permute.xlu0 %1009
    %1011 = vrot.lane.b32.xlu0 %v1008, 4
    %v1012 = vpop.permute.xlu0 %1011
    %vm1015 = vcmask 293920
    %1016 = vst.msk [vmem:[#allocation3 + $0x1] sm:$0xff] %vm1015, %v1010
    %1017 = vst.msk [vmem:[#allocation3 + $0x11] sm:$0xff] %vm1015, %v1012
    %v1018 = vld [vmem:[#allocation3] sm:$0xff]
    %v1019 = vld [vmem:[#allocation3 + $0x10] sm:$0xff]
    %v1020 = vld [vmem:[%s4] sm:$0xff]
    %v1021 = vld [vmem:[%s4 + $0x8] sm:$0xff]
    %v1022 = vld [vmem:[%s4 + $0x10] sm:$0xff]
    %v1023 = vld [vmem:[%s4 + $0x18] sm:$0xff]
    %v1024 = vld [vmem:[%s4 + $0x20] sm:$0xff]
    %v1025 = vld [vmem:[%s5] sm:$0xff]
    %v1026 = vld [vmem:[%s5 + $0x8] sm:$0xff]
    %v1027 = vld [vmem:[%s5 + $0x10] sm:$0xff]
    %v1028 = vld [vmem:[%s5 + $0x18] sm:$0xff]
    %v1029 = vld [vmem:[%s5 + $0x20] sm:$0xff]
    %v1030 = vld [vmem:[#allocation3 + $0x1] sm:$0xff]
    %v1031 = vld [vmem:[#allocation3 + $0x11] sm:$0xff]
    %s1032 = scalar_lea.vmem %s4, 40
    %v1033 = vld [vmem:[%s1032] sm:$0xff]
    %v1034 = vld [vmem:[%s1032 + $0x8] sm:$0xff]
    %v1035 = vld [vmem:[%s1032 + $0x10] sm:$0xff]
    %v1036 = vld [vmem:[%s1032 + $0x18] sm:$0xff]
    %v1037 = vld [vmem:[%s1032 + $0x20] sm:$0xff]
    %v1039 = vsel %vm902, %v1030, 0
    %v1042 = vsel %vm902, %v1031, 0
    %1044 = vmatprep.subr.mxu0 0.0
    %1045 = vmatpush1.msra.mxu0 %v1033
    %1046 = vmatprep.subr.mxu0 0.0
    %1047 = vmatpush1.msra.mxu0 %v1034
    %1048 = vmatprep.subr.mxu0 0.0
    %1049 = vmatpush1.msra.mxu0 %v1035
    %1050 = vmatprep.subr.mxu0 0.0
    %1051 = vmatpush1.msra.mxu0 %v1036
    %1052 = vmatprep.subr.mxu0 0.0
    %1053 = vmatpush1.msra.mxu0 %v1037
    %1054 = vmatprep.subr.mxu0 0.0
    %1055 = vmatpush1.msra.mxu0 0.0
    %1056 = vmatprep.subr.mxu0 0.0
    %1057 = vmatpush1.msra.mxu0 0.0
    %1058 = vmatprep.subr.mxu0 0.0
    %1059 = vmatpush1.msra.mxu0 0.0
    %1060 = vmatprep.subr.mxu0 0.0
    %1061 = vmatpush1.msra.mxu0 0.0
    %1062 = vmatprep.subr.mxu0 0.0
    %1063 = vmatpush1.msra.mxu0 0.0
    %1064 = vmatprep.subr.mxu0 0.0
    %1065 = vmatpush1.msra.mxu0 0.0
    %1066 = vmatprep.subr.mxu0 0.0
    %1067 = vmatpush1.msra.mxu0 0.0
    %1068 = vmatprep.subr.mxu0 0.0
    %1069 = vmatpush1.msra.mxu0 0.0
    %1070 = vmatprep.subr.mxu0 0.0
    %1071 = vmatpush1.msra.mxu0 0.0
    %1072 = vmatprep.subr.mxu0 0.0
    %1073 = vmatpush1.msra.mxu0 0.0
    %1074 = vmatprep.subr.mxu0 0.0
    %1075 = vmatpush1.msra.mxu0 0.0
    %1076 = vmatprep.subr.mxu0 0.0
    %1077 = vmatpush1.msra.mxu0 0.0
    %1078 = vmatprep.subr.mxu0 0.0
    %1079 = vmatpush1.msra.mxu0 0.0
    %1080 = vmatprep.subr.mxu0 0.0
    %1081 = vmatpush1.msra.mxu0 0.0
    %1082 = vmatprep.subr.mxu0 0.0
    %1083 = vmatpush1.msra.mxu0 0.0
    %1084 = vmatprep.subr.mxu0 0.0
    %1085 = vmatpush1.msra.mxu0 0.0
    %1086 = vmatprep.subr.mxu0 0.0
    %1087 = vmatpush1.msra.mxu0 0.0
    %1088 = vmatprep.subr.mxu0 0.0
    %1089 = vmatpush1.msra.mxu0 0.0
    %1090 = vmatprep.subr.mxu0 0.0
    %1091 = vmatpush1.msra.mxu0 0.0
    %1092 = vmatprep.subr.mxu0 0.0
    %1093 = vmatpush1.msra.mxu0 0.0
    %1094 = vmatprep.subr.mxu0 0.0
    %1095 = vmatpush1.msra.mxu0 0.0
    %1096 = vmatprep.subr.mxu0 0.0
    %1097 = vmatpush1.msra.mxu0 0.0
    %1098 = vmatprep.subr.mxu0 0.0
    %1099 = vmatpush1.msra.mxu0 0.0
    %1100 = vmatprep.subr.mxu0 0.0
    %1101 = vmatpush1.msra.mxu0 0.0
    %1102 = vmatprep.subr.mxu0 0.0
    %1103 = vmatpush1.msra.mxu0 0.0
    %1104 = vmatprep.subr.mxu0 0.0
    %1105 = vmatpush1.msra.mxu0 0.0
    %1106 = vmatprep.subr.mxu0 0.0
    %1107 = vmatpush1.msra.mxu0 0.0
    %1108 = vmatprep.mubr.f32.mxu0 0.0
    %1109 = vmatmul.mubr.f32.gmra.mrb[0].mxu0 %v1039
    %v1110 = vpop.f32.mrb[0].mxu0
    %v1111 = vadd.f32 0.0, %v1110
    %v1112 = vpop.f32.mrb[0].mxu0
    %1113 = vmatprep.mubr.f32.mxu0 0.0
    %1114 = vmatmul.mubr.f32.gmra.mrb[0].mxu0 %v1042
    %v1115 = vpop.f32.mrb[0].mxu0
    %v1116 = vadd.f32 0.0, %v1115
    %v1117 = vpop.f32.mrb[0].mxu0
    %1118 = vdwg.mxu0
    %v1120 = vsel %vm902, %v1018, 0
    %v1123 = vsel %vm902, %v1019, 0
    %1125 = vmatprep.subr.mxu0 0.0
    %1126 = vmatpush1.msra.mxu0 %v1020
    %1127 = vmatprep.subr.mxu0 0.0
    %1128 = vmatpush1.msra.mxu0 %v1021
    %1129 = vmatprep.subr.mxu0 0.0
    %1130 = vmatpush1.msra.mxu0 %v1022
    %1131 = vmatprep.subr.mxu0 0.0
    %1132 = vmatpush1.msra.mxu0 %v1023
    %1133 = vmatprep.subr.mxu0 0.0
    %1134 = vmatpush1.msra.mxu0 %v1024
    %1135 = vmatprep.subr.mxu0 0.0
    %1136 = vmatpush1.msra.mxu0 0.0
    %1137 = vmatprep.subr.mxu0 0.0
    %1138 = vmatpush1.msra.mxu0 0.0
    %1139 = vmatprep.subr.mxu0 0.0
    %1140 = vmatpush1.msra.mxu0 0.0
    %1141 = vmatprep.subr.mxu0 0.0
    %1142 = vmatpush1.msra.mxu0 0.0
    %1143 = vmatprep.subr.mxu0 0.0
    %1144 = vmatpush1.msra.mxu0 0.0
    %1145 = vmatprep.subr.mxu0 0.0
    %1146 = vmatpush1.msra.mxu0 0.0
    %1147 = vmatprep.subr.mxu0 0.0
    %1148 = vmatpush1.msra.mxu0 0.0
    %1149 = vmatprep.subr.mxu0 0.0
    %1150 = vmatpush1.msra.mxu0 0.0
    %1151 = vmatprep.subr.mxu0 0.0
    %1152 = vmatpush1.msra.mxu0 0.0
    %1153 = vmatprep.subr.mxu0 0.0
    %1154 = vmatpush1.msra.mxu0 0.0
    %1155 = vmatprep.subr.mxu0 0.0
    %1156 = vmatpush1.msra.mxu0 0.0
    %1157 = vmatprep.subr.mxu0 0.0
    %1158 = vmatpush1.msra.mxu0 0.0
    %1159 = vmatprep.subr.mxu0 0.0
    %1160 = vmatpush1.msra.mxu0 0.0
    %1161 = vmatprep.subr.mxu0 0.0
    %1162 = vmatpush1.msra.mxu0 0.0
    %1163 = vmatprep.subr.mxu0 0.0
    %1164 = vmatpush1.msra.mxu0 0.0
    %1165 = vmatprep.subr.mxu0 0.0
    %1166 = vmatpush1.msra.mxu0 0.0
    %1167 = vmatprep.subr.mxu0 0.0
    %1168 = vmatpush1.msra.mxu0 0.0
    %1169 = vmatprep.subr.mxu0 0.0
    %1170 = vmatpush1.msra.mxu0 0.0
    %1171 = vmatprep.subr.mxu0 0.0
    %1172 = vmatpush1.msra.mxu0 0.0
    %1173 = vmatprep.subr.mxu0 0.0
    %1174 = vmatpush1.msra.mxu0 0.0
    %1175 = vmatprep.subr.mxu0 0.0
    %1176 = vmatpush1.msra.mxu0 0.0
    %1177 = vmatprep.subr.mxu0 0.0
    %1178 = vmatpush1.msra.mxu0 0.0
    %1179 = vmatprep.subr.mxu0 0.0
    %1180 = vmatpush1.msra.mxu0 0.0
    %1181 = vmatprep.subr.mxu0 0.0
    %1182 = vmatpush1.msra.mxu0 0.0
    %1183 = vmatprep.subr.mxu0 0.0
    %1184 = vmatpush1.msra.mxu0 0.0
    %1185 = vmatprep.subr.mxu0 0.0
    %1186 = vmatpush1.msra.mxu0 0.0
    %1187 = vmatprep.subr.mxu0 0.0
    %1188 = vmatpush1.msra.mxu0 0.0
    %1189 = vmatprep.mubr.f32.mxu0 0.0
    %1190 = vmatmul.mubr.f32.gmra.mrb[0].mxu0 %v1120
    %v1191 = vpop.f32.mrb[0].mxu0
    %v1192 = vadd.f32 %v1111, %v1191
    %v1193 = vpop.f32.mrb[0].mxu0
    %1194 = vmatprep.mubr.f32.mxu0 0.0
    %1195 = vmatmul.mubr.f32.gmra.mrb[0].mxu0 %v1123
    %v1196 = vpop.f32.mrb[0].mxu0
    %v1197 = vadd.f32 %v1116, %v1196
    %v1198 = vpop.f32.mrb[0].mxu0
    %1199 = vdwg.mxu0
    %s1200 = scalar_lea.vmem %s5, 40
    %v1201 = vld [vmem:[%s1200] sm:$0xff]
    %v1202 = vld [vmem:[%s1200 + $0x8] sm:$0xff]
    %v1203 = vld [vmem:[%s1200 + $0x10] sm:$0xff]
    %v1204 = vld [vmem:[%s1200 + $0x18] sm:$0xff]
    %v1205 = vld [vmem:[%s1200 + $0x20] sm:$0xff]
    %1206 = vmatprep.subr.mxu0 0.0
    %1207 = vmatpush1.msra.mxu0 %v1201
    %1208 = vmatprep.subr.mxu0 0.0
    %1209 = vmatpush1.msra.mxu0 %v1202
    %1210 = vmatprep.subr.mxu0 0.0
    %1211 = vmatpush1.msra.mxu0 %v1203
    %1212 = vmatprep.subr.mxu0 0.0
    %1213 = vmatpush1.msra.mxu0 %v1204
    %1214 = vmatprep.subr.mxu0 0.0
    %1215 = vmatpush1.msra.mxu0 %v1205
    %1216 = vmatprep.subr.mxu0 0.0
    %1217 = vmatpush1.msra.mxu0 0.0
    %1218 = vmatprep.subr.mxu0 0.0
    %1219 = vmatpush1.msra.mxu0 0.0
    %1220 = vmatprep.subr.mxu0 0.0
    %1221 = vmatpush1.msra.mxu0 0.0
    %1222 = vmatprep.subr.mxu0 0.0
    %1223 = vmatpush1.msra.mxu0 0.0
    %1224 = vmatprep.subr.mxu0 0.0
    %1225 = vmatpush1.msra.mxu0 0.0
    %1226 = vmatprep.subr.mxu0 0.0
    %1227 = vmatpush1.msra.mxu0 0.0
    %1228 = vmatprep.subr.mxu0 0.0
    %1229 = vmatpush1.msra.mxu0 0.0
    %1230 = vmatprep.subr.mxu0 0.0
    %1231 = vmatpush1.msra.mxu0 0.0
    %1232 = vmatprep.subr.mxu0 0.0
    %1233 = vmatpush1.msra.mxu0 0.0
    %1234 = vmatprep.subr.mxu0 0.0
    %1235 = vmatpush1.msra.mxu0 0.0
    %1236 = vmatprep.subr.mxu0 0.0
    %1237 = vmatpush1.msra.mxu0 0.0
    %1238 = vmatprep.subr.mxu0 0.0
    %1239 = vmatpush1.msra.mxu0 0.0
    %1240 = vmatprep.subr.mxu0 0.0
    %1241 = vmatpush1.msra.mxu0 0.0
    %1242 = vmatprep.subr.mxu0 0.0
    %1243 = vmatpush1.msra.mxu0 0.0
    %1244 = vmatprep.subr.mxu0 0.0
    %1245 = vmatpush1.msra.mxu0 0.0
    %1246 = vmatprep.subr.mxu0 0.0
    %1247 = vmatpush1.msra.mxu0 0.0
    %1248 = vmatprep.subr.mxu0 0.0
    %1249 = vmatpush1.msra.mxu0 0.0
    %1250 = vmatprep.subr.mxu0 0.0
    %1251 = vmatpush1.msra.mxu0 0.0
    %1252 = vmatprep.subr.mxu0 0.0
    %1253 = vmatpush1.msra.mxu0 0.0
    %1254 = vmatprep.subr.mxu0 0.0
    %1255 = vmatpush1.msra.mxu0 0.0
    %1256 = vmatprep.subr.mxu0 0.0
    %1257 = vmatpush1.msra.mxu0 0.0
    %1258 = vmatprep.subr.mxu0 0.0
    %1259 = vmatpush1.msra.mxu0 0.0
    %1260 = vmatprep.subr.mxu0 0.0
    %1261 = vmatpush1.msra.mxu0 0.0
    %1262 = vmatprep.subr.mxu0 0.0
    %1263 = vmatpush1.msra.mxu0 0.0
    %1264 = vmatprep.subr.mxu0 0.0
    %1265 = vmatpush1.msra.mxu0 0.0
    %1266 = vmatprep.subr.mxu0 0.0
    %1267 = vmatpush1.msra.mxu0 0.0
    %1268 = vmatprep.subr.mxu0 0.0
    %1269 = vmatpush1.msra.mxu0 0.0
    %1270 = vmatprep.mubr.f32.mxu0 0.0
    %1271 = vmatmul.mubr.f32.gmra.mrb[0].mxu0 %v1039
    %v1272 = vpop.f32.mrb[0].mxu0
    %v1273 = vadd.f32 0.0, %v1272
    %v1274 = vpop.f32.mrb[0].mxu0
    %1275 = vmatprep.mubr.f32.mxu0 0.0
    %1276 = vmatmul.mubr.f32.gmra.mrb[0].mxu0 %v1042
    %v1277 = vpop.f32.mrb[0].mxu0
    %v1278 = vadd.f32 0.0, %v1277
    %v1279 = vpop.f32.mrb[0].mxu0
    %1280 = vdwg.mxu0
    %1281 = vmatprep.subr.mxu0 0.0
    %1282 = vmatpush1.msra.mxu0 %v1025
    %1283 = vmatprep.subr.mxu0 0.0
    %1284 = vmatpush1.msra.mxu0 %v1026
    %1285 = vmatprep.subr.mxu0 0.0
    %1286 = vmatpush1.msra.mxu0 %v1027
    %1287 = vmatprep.subr.mxu0 0.0
    %1288 = vmatpush1.msra.mxu0 %v1028
    %1289 = vmatprep.subr.mxu0 0.0
    %1290 = vmatpush1.msra.mxu0 %v1029
    %1291 = vmatprep.subr.mxu0 0.0
    %1292 = vmatpush1.msra.mxu0 0.0
    %1293 = vmatprep.subr.mxu0 0.0
    %1294 = vmatpush1.msra.mxu0 0.0
    %1295 = vmatprep.subr.mxu0 0.0
    %1296 = vmatpush1.msra.mxu0 0.0
    %1297 = vmatprep.subr.mxu0 0.0
    %1298 = vmatpush1.msra.mxu0 0.0
    %1299 = vmatprep.subr.mxu0 0.0
    %1300 = vmatpush1.msra.mxu0 0.0
    %1301 = vmatprep.subr.mxu0 0.0
    %1302 = vmatpush1.msra.mxu0 0.0
    %1303 = vmatprep.subr.mxu0 0.0
    %1304 = vmatpush1.msra.mxu0 0.0
    %1305 = vmatprep.subr.mxu0 0.0
    %1306 = vmatpush1.msra.mxu0 0.0
    %1307 = vmatprep.subr.mxu0 0.0
    %1308 = vmatpush1.msra.mxu0 0.0
    %1309 = vmatprep.subr.mxu0 0.0
    %1310 = vmatpush1.msra.mxu0 0.0
    %1311 = vmatprep.subr.mxu0 0.0
    %1312 = vmatpush1.msra.mxu0 0.0
    %1313 = vmatprep.subr.mxu0 0.0
    %1314 = vmatpush1.msra.mxu0 0.0
    %1315 = vmatprep.subr.mxu0 0.0
    %1316 = vmatpush1.msra.mxu0 0.0
    %1317 = vmatprep.subr.mxu0 0.0
    %1318 = vmatpush1.msra.mxu0 0.0
    %1319 = vmatprep.subr.mxu0 0.0
    %1320 = vmatpush1.msra.mxu0 0.0
    %1321 = vmatprep.subr.mxu0 0.0
    %1322 = vmatpush1.msra.mxu0 0.0
    %1323 = vmatprep.subr.mxu0 0.0
    %1324 = vmatpush1.msra.mxu0 0.0
    %1325 = vmatprep.subr.mxu0 0.0
    %1326 = vmatpush1.msra.mxu0 0.0
    %1327 = vmatprep.subr.mxu0 0.0
    %1328 = vmatpush1.msra.mxu0 0.0
    %1329 = vmatprep.subr.mxu0 0.0
    %1330 = vmatpush1.msra.mxu0 0.0
    %1331 = vmatprep.subr.mxu0 0.0
    %1332 = vmatpush1.msra.mxu0 0.0
    %1333 = vmatprep.subr.mxu0 0.0
    %1334 = vmatpush1.msra.mxu0 0.0
    %1335 = vmatprep.subr.mxu0 0.0
    %1336 = vmatpush1.msra.mxu0 0.0
    %1337 = vmatprep.subr.mxu0 0.0
    %1338 = vmatpush1.msra.mxu0 0.0
    %1339 = vmatprep.subr.mxu0 0.0
    %1340 = vmatpush1.msra.mxu0 0.0
    %1341 = vmatprep.subr.mxu0 0.0
    %1342 = vmatpush1.msra.mxu0 0.0
    %1343 = vmatprep.subr.mxu0 0.0
    %1344 = vmatpush1.msra.mxu0 0.0
    %1345 = vmatprep.mubr.f32.mxu0 0.0
    %1346 = vmatmul.mubr.f32.gmra.mrb[0].mxu0 %v1120
    %v1347 = vpop.f32.mrb[0].mxu0
    %v1348 = vadd.f32 %v1273, %v1347
    %v1349 = vpop.f32.mrb[0].mxu0
    %1350 = vmatprep.mubr.f32.mxu0 0.0
    %1351 = vmatmul.mubr.f32.gmra.mrb[0].mxu0 %v1123
    %v1352 = vpop.f32.mrb[0].mxu0
    %v1353 = vadd.f32 %v1278, %v1352
    %v1354 = vpop.f32.mrb[0].mxu0
    %1355 = vdwg.mxu0
    %v1356 = vld [vmem:[#allocation3 + $0x2] sm:$0xff]
    %v1357 = vld [vmem:[#allocation3 + $0x12] sm:$0xff]
    %s1358 = scalar_lea.vmem %s4, 80
    %v1359 = vld [vmem:[%s1358] sm:$0xff]
    %v1360 = vld [vmem:[%s1358 + $0x8] sm:$0xff]
    %v1361 = vld [vmem:[%s1358 + $0x10] sm:$0xff]
    %v1362 = vld [vmem:[%s1358 + $0x18] sm:$0xff]
    %v1363 = vld [vmem:[%s1358 + $0x20] sm:$0xff]
    %v1365 = vsel %vm902, %v1356, 0
    %v1368 = vsel %vm902, %v1357, 0
    %1370 = vmatprep.subr.mxu0 0.0
    %1371 = vmatpush1.msra.mxu0 %v1359
    %1372 = vmatprep.subr.mxu0 0.0
    %1373 = vmatpush1.msra.mxu0 %v1360
    %1374 = vmatprep.subr.mxu0 0.0
    %1375 = vmatpush1.msra.mxu0 %v1361
    %1376 = vmatprep.subr.mxu0 0.0
    %1377 = vmatpush1.msra.mxu0 %v1362
    %1378 = vmatprep.subr.mxu0 0.0
    %1379 = vmatpush1.msra.mxu0 %v1363
    %1380 = vmatprep.subr.mxu0 0.0
    %1381 = vmatpush1.msra.mxu0 0.0
    %1382 = vmatprep.subr.mxu0 0.0
    %1383 = vmatpush1.msra.mxu0 0.0
    %1384 = vmatprep.subr.mxu0 0.0
    %1385 = vmatpush1.msra.mxu0 0.0
    %1386 = vmatprep.subr.mxu0 0.0
    %1387 = vmatpush1.msra.mxu0 0.0
    %1388 = vmatprep.subr.mxu0 0.0
    %1389 = vmatpush1.msra.mxu0 0.0
    %1390 = vmatprep.subr.mxu0 0.0
    %1391 = vmatpush1.msra.mxu0 0.0
    %1392 = vmatprep.subr.mxu0 0.0
    %1393 = vmatpush1.msra.mxu0 0.0
    %1394 = vmatprep.subr.mxu0 0.0
    %1395 = vmatpush1.msra.mxu0 0.0
    %1396 = vmatprep.subr.mxu0 0.0
    %1397 = vmatpush1.msra.mxu0 0.0
    %1398 = vmatprep.subr.mxu0 0.0
    %1399 = vmatpush1.msra.mxu0 0.0
    %1400 = vmatprep.subr.mxu0 0.0
    %1401 = vmatpush1.msra.mxu0 0.0
    %1402 = vmatprep.subr.mxu0 0.0
    %1403 = vmatpush1.msra.mxu0 0.0
    %1404 = vmatprep.subr.mxu0 0.0
    %1405 = vmatpush1.msra.mxu0 0.0
    %1406 = vmatprep.subr.mxu0 0.0
    %1407 = vmatpush1.msra.mxu0 0.0
    %1408 = vmatprep.subr.mxu0 0.0
    %1409 = vmatpush1.msra.mxu0 0.0
    %1410 = vmatprep.subr.mxu0 0.0
    %1411 = vmatpush1.msra.mxu0 0.0
    %1412 = vmatprep.subr.mxu0 0.0
    %1413 = vmatpush1.msra.mxu0 0.0
    %1414 = vmatprep.subr.mxu0 0.0
    %1415 = vmatpush1.msra.mxu0 0.0
    %1416 = vmatprep.subr.mxu0 0.0
    %1417 = vmatpush1.msra.mxu0 0.0
    %1418 = vmatprep.subr.mxu0 0.0
    %1419 = vmatpush1.msra.mxu0 0.0
    %1420 = vmatprep.subr.mxu0 0.0
    %1421 = vmatpush1.msra.mxu0 0.0
    %1422 = vmatprep.subr.mxu0 0.0
    %1423 = vmatpush1.msra.mxu0 0.0
    %1424 = vmatprep.subr.mxu0 0.0
    %1425 = vmatpush1.msra.mxu0 0.0
    %1426 = vmatprep.subr.mxu0 0.0
    %1427 = vmatpush1.msra.mxu0 0.0
    %1428 = vmatprep.subr.mxu0 0.0
    %1429 = vmatpush1.msra.mxu0 0.0
    %1430 = vmatprep.subr.mxu0 0.0
    %1431 = vmatpush1.msra.mxu0 0.0
    %1432 = vmatprep.subr.mxu0 0.0
    %1433 = vmatpush1.msra.mxu0 0.0
    %1434 = vmatprep.mubr.f32.mxu0 0.0
    %1435 = vmatmul.mubr.f32.gmra.mrb[0].mxu0 %v1365
    %v1436 = vpop.f32.mrb[0].mxu0
    %v1437 = vadd.f32 0.0, %v1436
    %v1438 = vpop.f32.mrb[0].mxu0
    %1439 = vmatprep.mubr.f32.mxu0 0.0
    %1440 = vmatmul.mubr.f32.gmra.mrb[0].mxu0 %v1368
    %v1441 = vpop.f32.mrb[0].mxu0
    %v1442 = vadd.f32 0.0, %v1441
    %v1443 = vpop.f32.mrb[0].mxu0
    %1444 = vdwg.mxu0
    %v1445 = vadd.f32 %v1192, %v1437
    %v1446 = vadd.f32 %v1197, %v1442
    %s1447 = scalar_lea.vmem %s5, 80
    %v1448 = vld [vmem:[%s1447] sm:$0xff]
    %v1449 = vld [vmem:[%s1447 + $0x8] sm:$0xff]
    %v1450 = vld [vmem:[%s1447 + $0x10] sm:$0xff]
    %v1451 = vld [vmem:[%s1447 + $0x18] sm:$0xff]
    %v1452 = vld [vmem:[%s1447 + $0x20] sm:$0xff]
    %1453 = vmatprep.subr.mxu0 0.0
    %1454 = vmatpush1.msra.mxu0 %v1448
    %1455 = vmatprep.subr.mxu0 0.0
    %1456 = vmatpush1.msra.mxu0 %v1449
    %1457 = vmatprep.subr.mxu0 0.0
    %1458 = vmatpush1.msra.mxu0 %v1450
    %1459 = vmatprep.subr.mxu0 0.0
    %1460 = vmatpush1.msra.mxu0 %v1451
    %1461 = vmatprep.subr.mxu0 0.0
    %1462 = vmatpush1.msra.mxu0 %v1452
    %1463 = vmatprep.subr.mxu0 0.0
    %1464 = vmatpush1.msra.mxu0 0.0
    %1465 = vmatprep.subr.mxu0 0.0
    %1466 = vmatpush1.msra.mxu0 0.0
    %1467 = vmatprep.subr.mxu0 0.0
    %1468 = vmatpush1.msra.mxu0 0.0
    %1469 = vmatprep.subr.mxu0 0.0
    %1470 = vmatpush1.msra.mxu0 0.0
    %1471 = vmatprep.subr.mxu0 0.0
    %1472 = vmatpush1.msra.mxu0 0.0
    %1473 = vmatprep.subr.mxu0 0.0
    %1474 = vmatpush1.msra.mxu0 0.0
    %1475 = vmatprep.subr.mxu0 0.0
    %1476 = vmatpush1.msra.mxu0 0.0
    %1477 = vmatprep.subr.mxu0 0.0
    %1478 = vmatpush1.msra.mxu0 0.0
    %1479 = vmatprep.subr.mxu0 0.0
    %1480 = vmatpush1.msra.mxu0 0.0
    %1481 = vmatprep.subr.mxu0 0.0
    %1482 = vmatpush1.msra.mxu0 0.0
    %1483 = vmatprep.subr.mxu0 0.0
    %1484 = vmatpush1.msra.mxu0 0.0
    %1485 = vmatprep.subr.mxu0 0.0
    %1486 = vmatpush1.msra.mxu0 0.0
    %1487 = vmatprep.subr.mxu0 0.0
    %1488 = vmatpush1.msra.mxu0 0.0
    %1489 = vmatprep.subr.mxu0 0.0
    %1490 = vmatpush1.msra.mxu0 0.0
    %1491 = vmatprep.subr.mxu0 0.0
    %1492 = vmatpush1.msra.mxu0 0.0
    %1493 = vmatprep.subr.mxu0 0.0
    %1494 = vmatpush1.msra.mxu0 0.0
    %1495 = vmatprep.subr.mxu0 0.0
    %1496 = vmatpush1.msra.mxu0 0.0
    %1497 = vmatprep.subr.mxu0 0.0
    %1498 = vmatpush1.msra.mxu0 0.0
    %1499 = vmatprep.subr.mxu0 0.0
    %1500 = vmatpush1.msra.mxu0 0.0
    %1501 = vmatprep.subr.mxu0 0.0
    %1502 = vmatpush1.msra.mxu0 0.0
    %1503 = vmatprep.subr.mxu0 0.0
    %1504 = vmatpush1.msra.mxu0 0.0
    %1505 = vmatprep.subr.mxu0 0.0
    %1506 = vmatpush1.msra.mxu0 0.0
    %1507 = vmatprep.subr.mxu0 0.0
    %1508 = vmatpush1.msra.mxu0 0.0
    %1509 = vmatprep.subr.mxu0 0.0
    %1510 = vmatpush1.msra.mxu0 0.0
    %1511 = vmatprep.subr.mxu0 0.0
    %1512 = vmatpush1.msra.mxu0 0.0
    %1513 = vmatprep.subr.mxu0 0.0
    %1514 = vmatpush1.msra.mxu0 0.0
    %1515 = vmatprep.subr.mxu0 0.0
    %1516 = vmatpush1.msra.mxu0 0.0
    %1517 = vmatprep.mubr.f32.mxu0 0.0
    %1518 = vmatmul.mubr.f32.gmra.mrb[0].mxu0 %v1365
    %v1519 = vpop.f32.mrb[0].mxu0
    %v1520 = vadd.f32 0.0, %v1519
    %v1521 = vpop.f32.mrb[0].mxu0
    %1522 = vmatprep.mubr.f32.mxu0 0.0
    %1523 = vmatmul.mubr.f32.gmra.mrb[0].mxu0 %v1368
    %v1524 = vpop.f32.mrb[0].mxu0
    %v1525 = vadd.f32 0.0, %v1524
    %v1526 = vpop.f32.mrb[0].mxu0
    %1527 = vdwg.mxu0
    %v1528 = vadd.f32 %v1348, %v1520
    %v1529 = vadd.f32 %v1353, %v1525
    %v1530 = vmax.f32 %v1445, %v1528
    %v1531 = vmax.f32 %v1446, %v1529
    %v1534 = vcombine.high %v1530, %v1530
    %v1536 = vunpack.c.l.s4 1983009808
    %v1537 = vunpack.c.0.s8 %v1536
    %v1538 = vlaneseq
    %v1539 = vshrl.u32 %v1538, 7
    %v1540 = vsub.s32 %v1537, %v1539
    %v1541 = vrot.slane %v1530, %v1540
    %v1543 = vunpack.c.l.s4 1983009808
    %v1544 = vunpack.c.0.s8 %v1543
    %v1545 = vlaneseq
    %v1546 = vshrl.u32 %v1545, 7
    %v1547 = vsub.s32 %v1544, %v1546
    %v1548 = vrot.slane %v1534, %v1547
    %v1549 = vcombine.high %v1541, %v1541
    %v1550 = vcombine.high %v1548, %v1548
    %v1551 = vcombine.high %v1531, %v1531
    %v1553 = vunpack.c.l.s4 1983009808
    %v1554 = vunpack.c.0.s8 %v1553
    %v1555 = vlaneseq
    %v1556 = vshrl.u32 %v1555, 7
    %v1557 = vsub.s32 %v1554, %v1556
    %v1558 = vrot.slane %v1531, %v1557
    %v1560 = vunpack.c.l.s4 1983009808
    %v1561 = vunpack.c.0.s8 %v1560
    %v1562 = vlaneseq
    %v1563 = vshrl.u32 %v1562, 7
    %v1564 = vsub.s32 %v1561, %v1563
    %v1565 = vrot.slane %v1551, %v1564
    %v1566 = vcombine.high %v1558, %v1558
    %v1567 = vcombine.high %v1565, %v1565
    %v1576 = vrot.slane %v1541, 7
    %v1577 = vrot.slane %v1576, 2
    %v1578 = vrot.slane %v1549, 7
    %v1579 = vrot.slane %v1578, 2
    %v1580 = vrot.slane %v1548, 7
    %v1581 = vrot.slane %v1580, 2
    %v1582 = vrot.slane %v1550, 7
    %v1583 = vrot.slane %v1582, 2
    %v1584 = vrot.slane %v1558, 7
    %v1585 = vrot.slane %v1584, 2
    %v1586 = vrot.slane %v1566, 7
    %v1587 = vrot.slane %v1586, 2
    %v1588 = vrot.slane %v1565, 7
    %v1589 = vrot.slane %v1588, 2
    %v1590 = vrot.slane %v1567, 7
    %v1591 = vrot.slane %v1590, 2
    %v1600 = vmax.f32 %v1541, %v1577
    %v1601 = vmax.f32 %v1549, %v1579
    %v1602 = vmax.f32 %v1548, %v1581
    %v1603 = vmax.f32 %v1550, %v1583
    %v1604 = vmax.f32 %v1558, %v1585
    %v1605 = vmax.f32 %v1566, %v1587
    %v1606 = vmax.f32 %v1565, %v1589
    %v1607 = vmax.f32 %v1567, %v1591
    %v1608 = vld [vmem:[%s6] sm:$0x1]
    %v1610 = vlaneseq
    %v1611 = vshrl.u32 %v1610, 7
    %v1612 = vsub.s32 0, %v1611
    %v1613 = vrot.slane %v1608, %v1612
    %v1614 = vcombine.high %v1613, %v1613
    %v1616 = vunpack.c.l.s4 1983009808
    %v1617 = vunpack.c.0.s8 %v1616
    %v1618 = vlaneseq
    %v1619 = vshrl.u32 %v1618, 7
    %v1620 = vsub.s32 %v1617, %v1619
    %v1621 = vrot.slane %v1613, %v1620
    %v1623 = vunpack.c.l.s4 1983009808
    %v1624 = vunpack.c.0.s8 %v1623
    %v1625 = vlaneseq
    %v1626 = vshrl.u32 %v1625, 7
    %v1627 = vsub.s32 %v1624, %v1626
    %v1628 = vrot.slane %v1614, %v1627
    %v1629 = vcombine.high %v1621, %v1621
    %v1630 = vcombine.high %v1628, %v1628
    %v1631 = vrot.slane %v1621, 1
    %v1632 = vrot.slane %v1629, 1
    %v1633 = vrot.slane %v1628, 1
    %v1634 = vrot.slane %v1630, 1
    %v1643 = vadd.f32 %v1600, %v1621
    %v1644 = vadd.f32 %v1601, %v1631
    %v1645 = vadd.f32 %v1602, %v1629
    %v1646 = vadd.f32 %v1603, %v1632
    %v1647 = vadd.f32 %v1604, %v1628
    %v1648 = vadd.f32 %v1605, %v1633
    %v1649 = vadd.f32 %v1606, %v1630
    %v1650 = vadd.f32 %v1607, %v1634
    %v1651 = vmax.f32 %v1643, 0.0
    %v1652 = vmax.f32 %v1644, 0.0
    %v1653 = vmax.f32 %v1645, 0.0
    %v1654 = vmax.f32 %v1646, 0.0
    %v1655 = vmax.f32 %v1647, 0.0
    %v1656 = vmax.f32 %v1648, 0.0
    %v1657 = vmax.f32 %v1649, 0.0
    %v1658 = vmax.f32 %v1650, 0.0
    %v1659 = vld [vmem:[%s7] sm:$0xff]
    %v1660 = vld [vmem:[%s7 + $0x8] sm:$0xff]
    %v1661 = vld [vmem:[%s7 + $0x10] sm:$0xff]
    %v1662 = vld [vmem:[%s7 + $0x18] sm:$0xff]
    %s1663 = scalar_lea.vmem %s7, 32
    %v1664 = vld [vmem:[%s1663] sm:$0xff]
    %v1665 = vld [vmem:[%s1663 + $0x8] sm:$0xff]
    %v1666 = vld [vmem:[%s1663 + $0x10] sm:$0xff]
    %v1667 = vld [vmem:[%s1663 + $0x18] sm:$0xff]
    %v1670 = vlaneseq
    %v1671 = vshrl.u32 %v1670, 7
    %v1672 = vsub.s32 0, %v1671
    %v1673 = vrot.slane %v1652, %v1672
    %v1674 = vlaneseq
    %v1675 = vshrl.u32 %v1674, 7
    %v1676 = vsub.s32 0, %v1675
    %v1677 = vrot.slane %v1656, %v1676
    %v1678 = vsel %vm988, %v1677, %v1673
    %vm1679 = vcmask 261120
    %v1680 = vsel %vm1679, %v1678, 0
    %1682 = vmatprep.subr.mxu0 0.0
    %1683 = vmatpush1.msra.mxu0 %v1664
    %1684 = vmatprep.subr.mxu0 0.0
    %1685 = vmatpush1.msra.mxu0 %v1665
    %1686 = vmatprep.subr.mxu0 0.0
    %1687 = vmatpush1.msra.mxu0 %v1666
    %1688 = vmatprep.subr.mxu0 0.0
    %1689 = vmatpush1.msra.mxu0 %v1667
    %1690 = vmatprep.subr.mxu0 0.0
    %1691 = vmatpush1.msra.mxu0 0.0
    %1692 = vmatprep.subr.mxu0 0.0
    %1693 = vmatpush1.msra.mxu0 0.0
    %1694 = vmatprep.subr.mxu0 0.0
    %1695 = vmatpush1.msra.mxu0 0.0
    %1696 = vmatprep.subr.mxu0 0.0
    %1697 = vmatpush1.msra.mxu0 0.0
    %1698 = vmatprep.subr.mxu0 0.0
    %1699 = vmatpush1.msra.mxu0 0.0
    %1700 = vmatprep.subr.mxu0 0.0
    %1701 = vmatpush1.msra.mxu0 0.0
    %1702 = vmatprep.subr.mxu0 0.0
    %1703 = vmatpush1.msra.mxu0 0.0
    %1704 = vmatprep.subr.mxu0 0.0
    %1705 = vmatpush1.msra.mxu0 0.0
    %1706 = vmatprep.subr.mxu0 0.0
    %1707 = vmatpush1.msra.mxu0 0.0
    %1708 = vmatprep.subr.mxu0 0.0
    %1709 = vmatpush1.msra.mxu0 0.0
    %1710 = vmatprep.subr.mxu0 0.0
    %1711 = vmatpush1.msra.mxu0 0.0
    %1712 = vmatprep.subr.mxu0 0.0
    %1713 = vmatpush1.msra.mxu0 0.0
    %1714 = vmatprep.subr.mxu0 0.0
    %1715 = vmatpush1.msra.mxu0 0.0
    %1716 = vmatprep.subr.mxu0 0.0
    %1717 = vmatpush1.msra.mxu0 0.0
    %1718 = vmatprep.subr.mxu0 0.0
    %1719 = vmatpush1.msra.mxu0 0.0
    %1720 = vmatprep.subr.mxu0 0.0
    %1721 = vmatpush1.msra.mxu0 0.0
    %1722 = vmatprep.subr.mxu0 0.0
    %1723 = vmatpush1.msra.mxu0 0.0
    %1724 = vmatprep.subr.mxu0 0.0
    %1725 = vmatpush1.msra.mxu0 0.0
    %1726 = vmatprep.subr.mxu0 0.0
    %1727 = vmatpush1.msra.mxu0 0.0
    %1728 = vmatprep.subr.mxu0 0.0
    %1729 = vmatpush1.msra.mxu0 0.0
    %1730 = vmatprep.subr.mxu0 0.0
    %1731 = vmatpush1.msra.mxu0 0.0
    %1732 = vmatprep.subr.mxu0 0.0
    %1733 = vmatpush1.msra.mxu0 0.0
    %1734 = vmatprep.subr.mxu0 0.0
    %1735 = vmatpush1.msra.mxu0 0.0
    %1736 = vmatprep.subr.mxu0 0.0
    %1737 = vmatpush1.msra.mxu0 0.0
    %1738 = vmatprep.subr.mxu0 0.0
    %1739 = vmatpush1.msra.mxu0 0.0
    %1740 = vmatprep.subr.mxu0 0.0
    %1741 = vmatpush1.msra.mxu0 0.0
    %1742 = vmatprep.subr.mxu0 0.0
    %1743 = vmatpush1.msra.mxu0 0.0
    %1744 = vmatprep.subr.mxu0 0.0
    %1745 = vmatpush1.msra.mxu0 0.0
    %1746 = vmatprep.mubr.f32.mxu0 0.0
    %1747 = vmatmul.mubr.f32.gmra.mrb[0].mxu0 %v1680
    %v1748 = vpop.f32.mrb[0].mxu0
    %v1749 = vadd.f32 0.0, %v1748
    %v1750 = vpop.f32.mrb[0].mxu0
    %1751 = vdwg.mxu0
    %v1754 = vlaneseq
    %v1755 = vshrl.u32 %v1754, 7
    %v1756 = vsub.s32 0, %v1755
    %v1757 = vrot.slane %v1651, %v1756
    %v1758 = vlaneseq
    %v1759 = vshrl.u32 %v1758, 7
    %v1760 = vsub.s32 0, %v1759
    %v1761 = vrot.slane %v1655, %v1760
    %v1762 = vsel %vm988, %v1761, %v1757
    %v1763 = vsel %vm1679, %v1762, 0
    %1765 = vmatprep.subr.mxu0 0.0
    %1766 = vmatpush1.msra.mxu0 %v1659
    %1767 = vmatprep.subr.mxu0 0.0
    %1768 = vmatpush1.msra.mxu0 %v1660
    %1769 = vmatprep.subr.mxu0 0.0
    %1770 = vmatpush1.msra.mxu0 %v1661
    %1771 = vmatprep.subr.mxu0 0.0
    %1772 = vmatpush1.msra.mxu0 %v1662
    %1773 = vmatprep.subr.mxu0 0.0
    %1774 = vmatpush1.msra.mxu0 0.0
    %1775 = vmatprep.subr.mxu0 0.0
    %1776 = vmatpush1.msra.mxu0 0.0
    %1777 = vmatprep.subr.mxu0 0.0
    %1778 = vmatpush1.msra.mxu0 0.0
    %1779 = vmatprep.subr.mxu0 0.0
    %1780 = vmatpush1.msra.mxu0 0.0
    %1781 = vmatprep.subr.mxu0 0.0
    %1782 = vmatpush1.msra.mxu0 0.0
    %1783 = vmatprep.subr.mxu0 0.0
    %1784 = vmatpush1.msra.mxu0 0.0
    %1785 = vmatprep.subr.mxu0 0.0
    %1786 = vmatpush1.msra.mxu0 0.0
    %1787 = vmatprep.subr.mxu0 0.0
    %1788 = vmatpush1.msra.mxu0 0.0
    %1789 = vmatprep.subr.mxu0 0.0
    %1790 = vmatpush1.msra.mxu0 0.0
    %1791 = vmatprep.subr.mxu0 0.0
    %1792 = vmatpush1.msra.mxu0 0.0
    %1793 = vmatprep.subr.mxu0 0.0
    %1794 = vmatpush1.msra.mxu0 0.0
    %1795 = vmatprep.subr.mxu0 0.0
    %1796 = vmatpush1.msra.mxu0 0.0
    %1797 = vmatprep.subr.mxu0 0.0
    %1798 = vmatpush1.msra.mxu0 0.0
    %1799 = vmatprep.subr.mxu0 0.0
    %1800 = vmatpush1.msra.mxu0 0.0
    %1801 = vmatprep.subr.mxu0 0.0
    %1802 = vmatpush1.msra.mxu0 0.0
    %1803 = vmatprep.subr.mxu0 0.0
    %1804 = vmatpush1.msra.mxu0 0.0
    %1805 = vmatprep.subr.mxu0 0.0
    %1806 = vmatpush1.msra.mxu0 0.0
    %1807 = vmatprep.subr.mxu0 0.0
    %1808 = vmatpush1.msra.mxu0 0.0
    %1809 = vmatprep.subr.mxu0 0.0
    %1810 = vmatpush1.msra.mxu0 0.0
    %1811 = vmatprep.subr.mxu0 0.0
    %1812 = vmatpush1.msra.mxu0 0.0
    %1813 = vmatprep.subr.mxu0 0.0
    %1814 = vmatpush1.msra.mxu0 0.0
    %1815 = vmatprep.subr.mxu0 0.0
    %1816 = vmatpush1.msra.mxu0 0.0
    %1817 = vmatprep.subr.mxu0 0.0
    %1818 = vmatpush1.msra.mxu0 0.0
    %1819 = vmatprep.subr.mxu0 0.0
    %1820 = vmatpush1.msra.mxu0 0.0
    %1821 = vmatprep.subr.mxu0 0.0
    %1822 = vmatpush1.msra.mxu0 0.0
    %1823 = vmatprep.subr.mxu0 0.0
    %1824 = vmatpush1.msra.mxu0 0.0
    %1825 = vmatprep.subr.mxu0 0.0
    %1826 = vmatpush1.msra.mxu0 0.0
    %1827 = vmatprep.subr.mxu0 0.0
    %1828 = vmatpush1.msra.mxu0 0.0
    %1829 = vmatprep.mubr.f32.mxu0 0.0
    %1830 = vmatmul.mubr.f32.gmra.mrb[0].mxu0 %v1763
    %v1831 = vpop.f32.mrb[0].mxu0
    %v1832 = vadd.f32 %v1749, %v1831
    %v1833 = vpop.f32.mrb[0].mxu0
    %1834 = vdwg.mxu0
    %s1835 = scalar_lea.vmem %s7, 64
    %v1836 = vld [vmem:[%s1835] sm:$0xff]
    %v1837 = vld [vmem:[%s1835 + $0x8] sm:$0xff]
    %v1838 = vld [vmem:[%s1835 + $0x10] sm:$0xff]
    %v1839 = vld [vmem:[%s1835 + $0x18] sm:$0xff]
    %v1842 = vlaneseq
    %v1843 = vshrl.u32 %v1842, 7
    %v1844 = vsub.s32 0, %v1843
    %v1845 = vrot.slane %v1653, %v1844
    %v1846 = vlaneseq
    %v1847 = vshrl.u32 %v1846, 7
    %v1848 = vsub.s32 0, %v1847
    %v1849 = vrot.slane %v1657, %v1848
    %v1850 = vsel %vm988, %v1849, %v1845
    %v1851 = vsel %vm1679, %v1850, 0
    %1853 = vmatprep.subr.mxu0 0.0
    %1854 = vmatpush1.msra.mxu0 %v1836
    %1855 = vmatprep.subr.mxu0 0.0
    %1856 = vmatpush1.msra.mxu0 %v1837
    %1857 = vmatprep.subr.mxu0 0.0
    %1858 = vmatpush1.msra.mxu0 %v1838
    %1859 = vmatprep.subr.mxu0 0.0
    %1860 = vmatpush1.msra.mxu0 %v1839
    %1861 = vmatprep.subr.mxu0 0.0
    %1862 = vmatpush1.msra.mxu0 0.0
    %1863 = vmatprep.subr.mxu0 0.0
    %1864 = vmatpush1.msra.mxu0 0.0
    %1865 = vmatprep.subr.mxu0 0.0
    %1866 = vmatpush1.msra.mxu0 0.0
    %1867 = vmatprep.subr.mxu0 0.0
    %1868 = vmatpush1.msra.mxu0 0.0
    %1869 = vmatprep.subr.mxu0 0.0
    %1870 = vmatpush1.msra.mxu0 0.0
    %1871 = vmatprep.subr.mxu0 0.0
    %1872 = vmatpush1.msra.mxu0 0.0
    %1873 = vmatprep.subr.mxu0 0.0
    %1874 = vmatpush1.msra.mxu0 0.0
    %1875 = vmatprep.subr.mxu0 0.0
    %1876 = vmatpush1.msra.mxu0 0.0
    %1877 = vmatprep.subr.mxu0 0.0
    %1878 = vmatpush1.msra.mxu0 0.0
    %1879 = vmatprep.subr.mxu0 0.0
    %1880 = vmatpush1.msra.mxu0 0.0
    %1881 = vmatprep.subr.mxu0 0.0
    %1882 = vmatpush1.msra.mxu0 0.0
    %1883 = vmatprep.subr.mxu0 0.0
    %1884 = vmatpush1.msra.mxu0 0.0
    %1885 = vmatprep.subr.mxu0 0.0
    %1886 = vmatpush1.msra.mxu0 0.0
    %1887 = vmatprep.subr.mxu0 0.0
    %1888 = vmatpush1.msra.mxu0 0.0
    %1889 = vmatprep.subr.mxu0 0.0
    %1890 = vmatpush1.msra.mxu0 0.0
    %1891 = vmatprep.subr.mxu0 0.0
    %1892 = vmatpush1.msra.mxu0 0.0
    %1893 = vmatprep.subr.mxu0 0.0
    %1894 = vmatpush1.msra.mxu0 0.0
    %1895 = vmatprep.subr.mxu0 0.0
    %1896 = vmatpush1.msra.mxu0 0.0
    %1897 = vmatprep.subr.mxu0 0.0
    %1898 = vmatpush1.msra.mxu0 0.0
    %1899 = vmatprep.subr.mxu0 0.0
    %1900 = vmatpush1.msra.mxu0 0.0
    %1901 = vmatprep.subr.mxu0 0.0
    %1902 = vmatpush1.msra.mxu0 0.0
    %1903 = vmatprep.subr.mxu0 0.0
    %1904 = vmatpush1.msra.mxu0 0.0
    %1905 = vmatprep.subr.mxu0 0.0
    %1906 = vmatpush1.msra.mxu0 0.0
    %1907 = vmatprep.subr.mxu0 0.0
    %1908 = vmatpush1.msra.mxu0 0.0
    %1909 = vmatprep.subr.mxu0 0.0
    %1910 = vmatpush1.msra.mxu0 0.0
    %1911 = vmatprep.subr.mxu0 0.0
    %1912 = vmatpush1.msra.mxu0 0.0
    %1913 = vmatprep.subr.mxu0 0.0
    %1914 = vmatpush1.msra.mxu0 0.0
    %1915 = vmatprep.subr.mxu0 0.0
    %1916 = vmatpush1.msra.mxu0 0.0
    %1917 = vmatprep.mubr.f32.mxu0 0.0
    %1918 = vmatmul.mubr.f32.gmra.mrb[0].mxu0 %v1851
    %v1919 = vpop.f32.mrb[0].mxu0
    %v1920 = vadd.f32 0.0, %v1919
    %v1921 = vpop.f32.mrb[0].mxu0
    %1922 = vdwg.mxu0
    %v1923 = vadd.f32 %v1832, %v1920
    %s1924 = scalar_lea.vmem %s7, 96
    %v1925 = vld [vmem:[%s1924] sm:$0xff]
    %v1926 = vld [vmem:[%s1924 + $0x8] sm:$0xff]
    %v1927 = vld [vmem:[%s1924 + $0x10] sm:$0xff]
    %v1928 = vld [vmem:[%s1924 + $0x18] sm:$0xff]
    %v1931 = vlaneseq
    %v1932 = vshrl.u32 %v1931, 7
    %v1933 = vsub.s32 0, %v1932
    %v1934 = vrot.slane %v1654, %v1933
    %v1935 = vlaneseq
    %v1936 = vshrl.u32 %v1935, 7
    %v1937 = vsub.s32 0, %v1936
    %v1938 = vrot.slane %v1658, %v1937
    %v1939 = vsel %vm988, %v1938, %v1934
    %v1940 = vsel %vm1679, %v1939, 0
    %1942 = vmatprep.subr.mxu0 0.0
    %1943 = vmatpush1.msra.mxu0 %v1925
    %1944 = vmatprep.subr.mxu0 0.0
    %1945 = vmatpush1.msra.mxu0 %v1926
    %1946 = vmatprep.subr.mxu0 0.0
    %1947 = vmatpush1.msra.mxu0 %v1927
    %1948 = vmatprep.subr.mxu0 0.0
    %1949 = vmatpush1.msra.mxu0 %v1928
    %1950 = vmatprep.subr.mxu0 0.0
    %1951 = vmatpush1.msra.mxu0 0.0
    %1952 = vmatprep.subr.mxu0 0.0
    %1953 = vmatpush1.msra.mxu0 0.0
    %1954 = vmatprep.subr.mxu0 0.0
    %1955 = vmatpush1.msra.mxu0 0.0
    %1956 = vmatprep.subr.mxu0 0.0
    %1957 = vmatpush1.msra.mxu0 0.0
    %1958 = vmatprep.subr.mxu0 0.0
    %1959 = vmatpush1.msra.mxu0 0.0
    %1960 = vmatprep.subr.mxu0 0.0
    %1961 = vmatpush1.msra.mxu0 0.0
    %1962 = vmatprep.subr.mxu0 0.0
    %1963 = vmatpush1.msra.mxu0 0.0
    %1964 = vmatprep.subr.mxu0 0.0
    %1965 = vmatpush1.msra.mxu0 0.0
    %1966 = vmatprep.subr.mxu0 0.0
    %1967 = vmatpush1.msra.mxu0 0.0
    %1968 = vmatprep.subr.mxu0 0.0
    %1969 = vmatpush1.msra.mxu0 0.0
    %1970 = vmatprep.subr.mxu0 0.0
    %1971 = vmatpush1.msra.mxu0 0.0
    %1972 = vmatprep.subr.mxu0 0.0
    %1973 = vmatpush1.msra.mxu0 0.0
    %1974 = vmatprep.subr.mxu0 0.0
    %1975 = vmatpush1.msra.mxu0 0.0
    %1976 = vmatprep.subr.mxu0 0.0
    %1977 = vmatpush1.msra.mxu0 0.0
    %1978 = vmatprep.subr.mxu0 0.0
    %1979 = vmatpush1.msra.mxu0 0.0
    %1980 = vmatprep.subr.mxu0 0.0
    %1981 = vmatpush1.msra.mxu0 0.0
    %1982 = vmatprep.subr.mxu0 0.0
    %1983 = vmatpush1.msra.mxu0 0.0
    %1984 = vmatprep.subr.mxu0 0.0
    %1985 = vmatpush1.msra.mxu0 0.0
    %1986 = vmatprep.subr.mxu0 0.0
    %1987 = vmatpush1.msra.mxu0 0.0
    %1988 = vmatprep.subr.mxu0 0.0
    %1989 = vmatpush1.msra.mxu0 0.0
    %1990 = vmatprep.subr.mxu0 0.0
    %1991 = vmatpush1.msra.mxu0 0.0
    %1992 = vmatprep.subr.mxu0 0.0
    %1993 = vmatpush1.msra.mxu0 0.0
    %1994 = vmatprep.subr.mxu0 0.0
    %1995 = vmatpush1.msra.mxu0 0.0
    %1996 = vmatprep.subr.mxu0 0.0
    %1997 = vmatpush1.msra.mxu0 0.0
    %1998 = vmatprep.subr.mxu0 0.0
    %1999 = vmatpush1.msra.mxu0 0.0
    %2000 = vmatprep.subr.mxu0 0.0
    %2001 = vmatpush1.msra.mxu0 0.0
    %2002 = vmatprep.subr.mxu0 0.0
    %2003 = vmatpush1.msra.mxu0 0.0
    %2004 = vmatprep.subr.mxu0 0.0
    %2005 = vmatpush1.msra.mxu0 0.0
    %2006 = vmatprep.mubr.f32.mxu0 0.0
    %2007 = vmatmul.mubr.f32.gmra.mrb[0].mxu0 %v1940
    %v2008 = vpop.f32.mrb[0].mxu0
    %v2009 = vadd.f32 0.0, %v2008
    %v2010 = vpop.f32.mrb[0].mxu0
    %2011 = vdwg.mxu0
    %v2012 = vadd.f32 %v1923, %v2009
    %v2013 = vld [vmem:[%s8] sm:$0x1]
    %v2015 = vlaneseq
    %v2016 = vshrl.u32 %v2015, 7
    %v2017 = vsub.s32 0, %v2016
    %v2018 = vrot.slane %v2013, %v2017
    %v2020 = vadd.f32 %v2012, %v2018
    %v2021 = vmax.f32 %v2020, 0.0
    %v2022 = vld [vmem:[%s9] sm:$0xff]
    %v2023 = vld [vmem:[%s9 + $0x8] sm:$0xff]
    %v2024 = vld [vmem:[%s9 + $0x10] sm:$0xff]
    %v2025 = vld [vmem:[%s9 + $0x18] sm:$0xff]
    %v2026 = vld [vmem:[%s10] sm:$0x1]
    %v2028 = vlaneseq
    %v2029 = vshrl.u32 %v2028, 7
    %v2030 = vsub.s32 0, %v2029
    %v2031 = vrot.slane %v2026, %v2030
    %v2034 = vsel %vm1679, %v2021, 0
    %2036 = vmatprep.subr.mxu0 0.0
    %2037 = vmatpush1.msra.mxu0 %v2022
    %2038 = vmatprep.subr.mxu0 0.0
    %2039 = vmatpush1.msra.mxu0 %v2023
    %2040 = vmatprep.subr.mxu0 0.0
    %2041 = vmatpush1.msra.mxu0 %v2024
    %2042 = vmatprep.subr.mxu0 0.0
    %2043 = vmatpush1.msra.mxu0 %v2025
    %2044 = vmatprep.subr.mxu0 0.0
    %2045 = vmatpush1.msra.mxu0 0.0
    %2046 = vmatprep.subr.mxu0 0.0
    %2047 = vmatpush1.msra.mxu0 0.0
    %2048 = vmatprep.subr.mxu0 0.0
    %2049 = vmatpush1.msra.mxu0 0.0
    %2050 = vmatprep.subr.mxu0 0.0
    %2051 = vmatpush1.msra.mxu0 0.0
    %2052 = vmatprep.subr.mxu0 0.0
    %2053 = vmatpush1.msra.mxu0 0.0
    %2054 = vmatprep.subr.mxu0 0.0
    %2055 = vmatpush1.msra.mxu0 0.0
    %2056 = vmatprep.subr.mxu0 0.0
    %2057 = vmatpush1.msra.mxu0 0.0
    %2058 = vmatprep.subr.mxu0 0.0
    %2059 = vmatpush1.msra.mxu0 0.0
    %2060 = vmatprep.subr.mxu0 0.0
    %2061 = vmatpush1.msra.mxu0 0.0
    %2062 = vmatprep.subr.mxu0 0.0
    %2063 = vmatpush1.msra.mxu0 0.0
    %2064 = vmatprep.subr.mxu0 0.0
    %2065 = vmatpush1.msra.mxu0 0.0
    %2066 = vmatprep.subr.mxu0 0.0
    %2067 = vmatpush1.msra.mxu0 0.0
    %2068 = vmatprep.subr.mxu0 0.0
    %2069 = vmatpush1.msra.mxu0 0.0
    %2070 = vmatprep.subr.mxu0 0.0
    %2071 = vmatpush1.msra.mxu0 0.0
    %2072 = vmatprep.subr.mxu0 0.0
    %2073 = vmatpush1.msra.mxu0 0.0
    %2074 = vmatprep.subr.mxu0 0.0
    %2075 = vmatpush1.msra.mxu0 0.0
    %2076 = vmatprep.subr.mxu0 0.0
    %2077 = vmatpush1.msra.mxu0 0.0
    %2078 = vmatprep.subr.mxu0 0.0
    %2079 = vmatpush1.msra.mxu0 0.0
    %2080 = vmatprep.subr.mxu0 0.0
    %2081 = vmatpush1.msra.mxu0 0.0
    %2082 = vmatprep.subr.mxu0 0.0
    %2083 = vmatpush1.msra.mxu0 0.0
    %2084 = vmatprep.subr.mxu0 0.0
    %2085 = vmatpush1.msra.mxu0 0.0
    %2086 = vmatprep.subr.mxu0 0.0
    %2087 = vmatpush1.msra.mxu0 0.0
    %2088 = vmatprep.subr.mxu0 0.0
    %2089 = vmatpush1.msra.mxu0 0.0
    %2090 = vmatprep.subr.mxu0 0.0
    %2091 = vmatpush1.msra.mxu0 0.0
    %2092 = vmatprep.subr.mxu0 0.0
    %2093 = vmatpush1.msra.mxu0 0.0
    %2094 = vmatprep.subr.mxu0 0.0
    %2095 = vmatpush1.msra.mxu0 0.0
    %2096 = vmatprep.subr.mxu0 0.0
    %2097 = vmatpush1.msra.mxu0 0.0
    %2098 = vmatprep.subr.mxu0 0.0
    %2099 = vmatpush1.msra.mxu0 0.0
    %2100 = vmatprep.mubr.f32.mxu0 0.0
    %2101 = vmatmul.mubr.f32.gmra.mrb[0].mxu0 %v2034
    %v2102 = vpop.f32.mrb[0].mxu0
    %v2103 = vadd.f32 %v2031, %v2102
    %v2104 = vpop.f32.mrb[0].mxu0
    %2105 = vdwg.mxu0
    %2106 = vst [vmem:[#allocation4] sm:$0x3] %v2103
    // Predicated region
    $region46: #{cnn_forward.1} parent=1 // pred_check
      _
    $region47: #{cnn_forward.1} parent=1 // pred_check_branch
      %2108 = sbr.rel (0) target = $region49
    $region48: #{cnn_forward.1} parent=1 // pred_region
      %s2110 = ssub.s32 32, 32
      %2111 = vsyncadd [#allocation5], %s2110
      %s2113 = sshll.u32 [#allocation4], 4
      %s2114 = int_to_ptr.vmem [resolvable:$true] %s2113
      %2116 = dma.vmem_to_hbm [thread:$0]  %s2114, 32, %s11, [#allocation5]
    $region49: #{cnn_forward.1} parent=1 // pred_fallthru
      _
    // Predicated region
    $region50: #{cnn_forward.1} parent=1 // pred_check
      _
    $region51: #{cnn_forward.1} parent=1 // pred_check_branch
      %2118 = sbr.rel (0) target = $region53
    $region52: #{cnn_forward.1} parent=1 // pred_region
      %2119 = dma.done [#allocation5], 32
    $region53: #{cnn_forward.1} parent=1 // pred_fallthru
      _
    %2120 = vsyncpa [#allocation5], 1

</llo_original>
